<compile_context>
chip_gen: v6e
topology: v6e:2x2x1
jax: 0.10.0
libtpu: 0.0.40
codegen_flags: <defaults>
</compile_context>

<pallas_src>
import functools

import jax
import jax.numpy as jnp
import numpy as np
from jax import lax
from jax.experimental import pallas as pl
from jax.experimental.pallas import tpu as pltpu


def _cdiv(a, b):
    return (a + b - 1) // b


def _round_up(a, b):
    return _cdiv(a, b) * b


@functools.lru_cache(maxsize=1)
def _vmem_limit_bytes():
    """Generation-aware VMEM budget (~65% of per-core capacity)."""
    fallback = 40 * 1024 * 1024
    try:
        cap = getattr(pltpu.get_tpu_info(), "vmem_capacity_bytes", None)
    except Exception:
        cap = None
    if not cap:
        return fallback
    return min(int(cap * 0.65), 100 * 1024 * 1024)


# ----------------------------- Pallas kernel ------------------------------ #
def _conv_bn_act_kernel(x_ref, w_ref, scale_ref, shift_ref, o_ref, slab_ref,
                        *, k, s, d, c1, th, ow):
    """One (image, row-tile) grid step.

    x_ref:     (HP, WP, C1)     padded image, bf16, resident in VMEM
    w_ref:     (k*k*C1, C2o)    unscaled conv weights, bf16
    scale_ref: (1, C2o)         BN scale, f32
    shift_ref: (1, C2o)         BN shift, f32
    o_ref:     (th*OW, C2o)     output row tile, bf16
    slab_ref:  (th*OW, k*k*C1)  im2col slab scratch, bf16
    """
    r = pl.program_id(1)
    row0 = pl.multiple_of(r * (th * s), th * s)

    # Build the im2col slab: one shifted (th, OW, C1) window per tap, written
    # to its own lane slice, so the matmul below contracts over k*k*C1 at once.
    for ki in range(k):
        for kj in range(k):
            if s == 1:
                win = x_ref[pl.ds(row0 + ki * d, th), pl.ds(kj * d, ow), :]
            else:
                win = x_ref[pl.ds(row0 + ki * d, th, stride=s),
                            pl.ds(kj * d, ow, stride=s), :]
            t = ki * k + kj
            slab_ref[:, t * c1:(t + 1) * c1] = win.reshape(th * ow, c1)

    # Single big-K matmul on the MXU (f32 accumulation).
    acc = jnp.dot(slab_ref[...], w_ref[...], preferred_element_type=jnp.float32)

    # BatchNorm (inference, f32 scale/shift) + LeakyReLU(0.1) epilogue.
    y = acc * scale_ref[...] + shift_ref[...]
    y = jnp.where(y > 0, y, 0.1 * y)
    o_ref[...] = y.astype(o_ref.dtype)


# ------------------------------- JAX glue ---------------------------------- #
def _pick_row_tile(n, oh, ow):
    """Output rows per grid step: ~1K matmul rows, but keep >=4 grid steps."""
    th = max(1, min(oh, 1024 // max(ow, 1)))
    while th > 1 and n * _cdiv(oh, th) < 4:
        th = _cdiv(th, 2)
    return th


@functools.partial(jax.jit, static_argnames=("k", "s", "p", "d", "eps"))
def conv_forward(x_nchw, weight, gamma, beta, run_mean, run_var,
                 *, k, s, p, d, eps=1e-5):
    """Conv2d(bias=False, g=1) -> BatchNorm2d (eval) -> LeakyReLU(0.1); NCHW in/out."""
    N, C1, H, W = x_nchw.shape
    C2 = weight.shape[0]
    OH = (H + 2 * p - d * (k - 1) - 1) // s + 1
    OW = (W + 2 * p - d * (k - 1) - 1) // s + 1

    th = _pick_row_tile(N, OH, OW)
    n_rb = _cdiv(OH, th)
    if n_rb > 1 and (th * OW) % 8 != 0:     # keep the output tile sublane-clean
        th, n_rb = OH, 1
    OH_a = n_rb * th                         # row-padded output height

    # Pad output channels to a lane-dense 128 only when the overhead is small;
    # for C2 << 128 masked stores beat 16x HBM write amplification.
    C2r = _round_up(C2, 128)
    C2o = C2r if 2 * C2r <= 3 * C2 else C2

    KKC1 = k * k * C1

    WP = W + 2 * p
    HP_need = (OH_a - 1) * s + (k - 1) * d + 1
    extra_h = max(0, HP_need - (H + 2 * p))  # keep ragged row tiles in-bounds
    HP_a = H + 2 * p + extra_h

    # NCHW -> NHWC, spatial zero-pad, bf16 for the MXU (one fused XLA pass).
    x_nhwc = jnp.transpose(x_nchw, (0, 2, 3, 1))
    x_pad = jnp.pad(x_nhwc, ((0, 0), (p, p + extra_h), (p, p), (0, 0)))
    x_pad = x_pad.astype(jnp.bfloat16)

    # Unscaled weights in bf16, (ki, kj, c1)-major rows to match the slab.
    w_slab = jnp.transpose(weight, (2, 3, 1, 0)).reshape(KKC1, C2)
    w_slab = jnp.pad(w_slab, ((0, 0), (0, C2o - C2))).astype(jnp.bfloat16)

    # BN folded to per-channel scale/shift, applied in f32 in the epilogue.
    scale = gamma / jnp.sqrt(run_var + eps)                      # (C2,)
    shift = beta - run_mean * scale                              # (C2,)
    scale_p = jnp.pad(scale, (0, C2o - C2)).reshape(1, C2o).astype(jnp.float32)
    shift_p = jnp.pad(shift, (0, C2o - C2)).reshape(1, C2o).astype(jnp.float32)

    kernel = functools.partial(_conv_bn_act_kernel,
                               k=k, s=s, d=d, c1=C1, th=th, ow=OW)

    out = pl.pallas_call(
        kernel,
        out_shape=jax.ShapeDtypeStruct((N, OH_a * OW, C2o), jnp.bfloat16),
        grid_spec=pltpu.PrefetchScalarGridSpec(
            num_scalar_prefetch=0,
            grid=(N, n_rb),
            in_specs=[
                # Whole padded image; block index is constant across the row
                # axis, so the pipeliner DMAs it from HBM once per image.
                pl.BlockSpec((None, HP_a, WP, C1), lambda n, r: (n, 0, 0, 0)),
                pl.BlockSpec((KKC1, C2o), lambda n, r: (0, 0)),
                pl.BlockSpec((1, C2o), lambda n, r: (0, 0)),
                pl.BlockSpec((1, C2o), lambda n, r: (0, 0)),
            ],
            out_specs=pl.BlockSpec((None, th * OW, C2o),
                                   lambda n, r: (n, r, 0)),
            scratch_shapes=[pltpu.VMEM((th * OW, KKC1), jnp.bfloat16)],
        ),
        compiler_params=pltpu.CompilerParams(
            dimension_semantics=("parallel", "parallel"),
            vmem_limit_bytes=_vmem_limit_bytes()),
    )(x_pad, w_slab, scale_p, shift_p)

    out = out.reshape(N, OH_a, OW, C2o)[:, :OH, :, :C2]   # drop row/chan pad
    return jnp.transpose(out, (0, 3, 1, 2)).astype(jnp.float32)  # NHWC -> NCHW


# ------------------------------- reference --------------------------------- #
def conv_reference(x_nchw, weight, gamma, beta, run_mean, run_var,
                   *, k, s, p, d, eps=1e-5):
    y = lax.conv_general_dilated(
        x_nchw, weight,
        window_strides=(s, s),
        padding=((p, p), (p, p)),
        rhs_dilation=(d, d),
        dimension_numbers=("NCHW", "OIHW", "NCHW"))
    scale = (gamma / jnp.sqrt(run_var + eps)).reshape(1, -1, 1, 1)
    shift = (beta - run_mean * gamma / jnp.sqrt(run_var + eps)).reshape(1, -1, 1, 1)
    y = y * scale + shift
    return jnp.where(y > 0, y, 0.1 * y)


# --------------------------------- main ------------------------------------ #
if __name__ == "__main__":
    # Conv(c1=4, c2=8, k=3, p=1, s=1, d=1, g=1, act='lrelu', bias=False)
    N, C1, H, W = 2, 4, 16, 16
    C2, K, P, S, D = 8, 3, 1, 1, 1

    key = jax.random.PRNGKey(0)
    kx, kw, kg, kb, km, kv = jax.random.split(key, 6)

    x = jax.random.normal(kx, (N, C1, H, W), dtype=jnp.float32)
    weight = jax.random.normal(kw, (C2, C1, K, K), dtype=jnp.float32) * 0.1
    gamma = 1.0 + 0.1 * jax.random.normal(kg, (C2,), dtype=jnp.float32)
    beta = 0.1 * jax.random.normal(kb, (C2,), dtype=jnp.float32)
    run_mean = 0.1 * jax.random.normal(km, (C2,), dtype=jnp.float32)
    run_var = jnp.abs(1.0 + 0.1 * jax.random.normal(kv, (C2,), dtype=jnp.float32))

    out = conv_forward(x, weight, gamma, beta, run_mean, run_var,
                       k=K, s=S, p=P, d=D)
    out = jax.block_until_ready(out)

    ref = conv_reference(x, weight, gamma, beta, run_mean, run_var,
                         k=K, s=S, p=P, d=D)
    # bf16 matmul inputs + bf16 output storage -> looser tolerance than f32.
    np.testing.assert_allclose(np.asarray(out), np.asarray(ref),
                               rtol=5e-2, atol=5e-2)
    print("KERNEL_OK")
</pallas_src>

<mosaic_0001>
module attributes {stable_mosaic.version = 11 : i64} {
  func.func @_conv_bn_act_kernel(%arg0: i32, %arg1: i32, %arg2: memref<1x18x18x4xbf16, #tpu.memory_space<vmem>>, %arg3: memref<36x8xbf16, #tpu.memory_space<vmem>>, %arg4: memref<1x8xf32, #tpu.memory_space<vmem>>, %arg5: memref<1x8xf32, #tpu.memory_space<vmem>>, %arg6: memref<1x128x8xbf16, #tpu.memory_space<vmem>>, %arg7: memref<128x36xbf16, #tpu.memory_space<vmem>>) attributes {dimension_semantics = [#tpu.dimension_semantics<parallel>, #tpu.dimension_semantics<parallel>], iteration_bounds = array<i64: 2, 2>, scalar_prefetch = 0 : i64, scratch_operands = 1 : i64, tpu.core_type = #tpu.core_type<tc>, window_params = [{transform_indices = @transform_0, window_bounds = array<i64: 1, 18, 18, 4>}, {pipeline_mode = #tpu.pipeline_mode<synchronous>, transform_indices = @transform_1, window_bounds = array<i64: 36, 8>}, {pipeline_mode = #tpu.pipeline_mode<synchronous>, transform_indices = @transform_2, window_bounds = array<i64: 1, 8>}, {pipeline_mode = #tpu.pipeline_mode<synchronous>, transform_indices = @transform_3, window_bounds = array<i64: 1, 8>}, {transform_indices = @transform_4, window_bounds = array<i64: 1, 128, 8>}]} {
    %c8_i32 = arith.constant 8 : i32
    %0 = arith.muli %arg1, %c8_i32 : i32
    %1 = tpu.assume_multiple %0, 8 : i32
    %c0_i32 = arith.constant 0 : i32
    %2 = arith.addi %1, %c0_i32 : i32
    %c0 = arith.constant 0 : index
    %3 = arith.index_cast %2 : i32 to index
    %c0_0 = arith.constant 0 : index
    %c0_1 = arith.constant 0 : index
    %4 = vector.load %arg2[%c0, %3, %c0_0, %c0_1] : memref<1x18x18x4xbf16, #tpu.memory_space<vmem>>, vector<1x8x16x4xbf16>
    %5 = vector.shape_cast %4 : vector<1x8x16x4xbf16> to vector<8x16x4xbf16>
    %6 = vector.shape_cast %5 : vector<8x16x4xbf16> to vector<128x4xbf16>
    %c0_2 = arith.constant 0 : index
    %c0_3 = arith.constant 0 : index
    %7 = vector.load %arg7[%c0_2, %c0_3] : memref<128x36xbf16, #tpu.memory_space<vmem>>, vector<128x4xbf16>
    tpu.vector_store %arg7[%c0_2, %c0_3], %6 {strides = array<i32>} : memref<128x36xbf16, #tpu.memory_space<vmem>>, vector<128x4xbf16>,
    %c0_i32_4 = arith.constant 0 : i32
    %8 = arith.addi %1, %c0_i32_4 : i32
    %c0_5 = arith.constant 0 : index
    %9 = arith.index_cast %8 : i32 to index
    %c1 = arith.constant 1 : index
    %c0_6 = arith.constant 0 : index
    %10 = vector.load %arg2[%c0_5, %9, %c1, %c0_6] : memref<1x18x18x4xbf16, #tpu.memory_space<vmem>>, vector<1x8x16x4xbf16>
    %11 = vector.shape_cast %10 : vector<1x8x16x4xbf16> to vector<8x16x4xbf16>
    %12 = vector.shape_cast %11 : vector<8x16x4xbf16> to vector<128x4xbf16>
    %c0_7 = arith.constant 0 : index
    %c4 = arith.constant 4 : index
    %13 = vector.load %arg7[%c0_7, %c4] : memref<128x36xbf16, #tpu.memory_space<vmem>>, vector<128x4xbf16>
    tpu.vector_store %arg7[%c0_7, %c4], %12 {strides = array<i32>} : memref<128x36xbf16, #tpu.memory_space<vmem>>, vector<128x4xbf16>,
    %c0_i32_8 = arith.constant 0 : i32
    %14 = arith.addi %1, %c0_i32_8 : i32
    %c0_9 = arith.constant 0 : index
    %15 = arith.index_cast %14 : i32 to index
    %c2 = arith.constant 2 : index
    %c0_10 = arith.constant 0 : index
    %16 = vector.load %arg2[%c0_9, %15, %c2, %c0_10] : memref<1x18x18x4xbf16, #tpu.memory_space<vmem>>, vector<1x8x16x4xbf16>
    %17 = vector.shape_cast %16 : vector<1x8x16x4xbf16> to vector<8x16x4xbf16>
    %18 = vector.shape_cast %17 : vector<8x16x4xbf16> to vector<128x4xbf16>
    %c0_11 = arith.constant 0 : index
    %c8 = arith.constant 8 : index
    %19 = vector.load %arg7[%c0_11, %c8] : memref<128x36xbf16, #tpu.memory_space<vmem>>, vector<128x4xbf16>
    tpu.vector_store %arg7[%c0_11, %c8], %18 {strides = array<i32>} : memref<128x36xbf16, #tpu.memory_space<vmem>>, vector<128x4xbf16>,
    %c1_i32 = arith.constant 1 : i32
    %20 = arith.addi %1, %c1_i32 : i32
    %c0_12 = arith.constant 0 : index
    %21 = arith.index_cast %20 : i32 to index
    %c0_13 = arith.constant 0 : index
    %c0_14 = arith.constant 0 : index
    %22 = vector.load %arg2[%c0_12, %21, %c0_13, %c0_14] : memref<1x18x18x4xbf16, #tpu.memory_space<vmem>>, vector<1x8x16x4xbf16>
    %23 = vector.shape_cast %22 : vector<1x8x16x4xbf16> to vector<8x16x4xbf16>
    %24 = vector.shape_cast %23 : vector<8x16x4xbf16> to vector<128x4xbf16>
    %c0_15 = arith.constant 0 : index
    %c12 = arith.constant 12 : index
    %25 = vector.load %arg7[%c0_15, %c12] : memref<128x36xbf16, #tpu.memory_space<vmem>>, vector<128x4xbf16>
    tpu.vector_store %arg7[%c0_15, %c12], %24 {strides = array<i32>} : memref<128x36xbf16, #tpu.memory_space<vmem>>, vector<128x4xbf16>,
    %c1_i32_16 = arith.constant 1 : i32
    %26 = arith.addi %1, %c1_i32_16 : i32
    %c0_17 = arith.constant 0 : index
    %27 = arith.index_cast %26 : i32 to index
    %c1_18 = arith.constant 1 : index
    %c0_19 = arith.constant 0 : index
    %28 = vector.load %arg2[%c0_17, %27, %c1_18, %c0_19] : memref<1x18x18x4xbf16, #tpu.memory_space<vmem>>, vector<1x8x16x4xbf16>
    %29 = vector.shape_cast %28 : vector<1x8x16x4xbf16> to vector<8x16x4xbf16>
    %30 = vector.shape_cast %29 : vector<8x16x4xbf16> to vector<128x4xbf16>
    %c0_20 = arith.constant 0 : index
    %c16 = arith.constant 16 : index
    %31 = vector.load %arg7[%c0_20, %c16] : memref<128x36xbf16, #tpu.memory_space<vmem>>, vector<128x4xbf16>
    tpu.vector_store %arg7[%c0_20, %c16], %30 {strides = array<i32>} : memref<128x36xbf16, #tpu.memory_space<vmem>>, vector<128x4xbf16>,
    %c1_i32_21 = arith.constant 1 : i32
    %32 = arith.addi %1, %c1_i32_21 : i32
    %c0_22 = arith.constant 0 : index
    %33 = arith.index_cast %32 : i32 to index
    %c2_23 = arith.constant 2 : index
    %c0_24 = arith.constant 0 : index
    %34 = vector.load %arg2[%c0_22, %33, %c2_23, %c0_24] : memref<1x18x18x4xbf16, #tpu.memory_space<vmem>>, vector<1x8x16x4xbf16>
    %35 = vector.shape_cast %34 : vector<1x8x16x4xbf16> to vector<8x16x4xbf16>
    %36 = vector.shape_cast %35 : vector<8x16x4xbf16> to vector<128x4xbf16>
    %c0_25 = arith.constant 0 : index
    %c20 = arith.constant 20 : index
    %37 = vector.load %arg7[%c0_25, %c20] : memref<128x36xbf16, #tpu.memory_space<vmem>>, vector<128x4xbf16>
    tpu.vector_store %arg7[%c0_25, %c20], %36 {strides = array<i32>} : memref<128x36xbf16, #tpu.memory_space<vmem>>, vector<128x4xbf16>,
    %c2_i32 = arith.constant 2 : i32
    %38 = arith.addi %1, %c2_i32 : i32
    %c0_26 = arith.constant 0 : index
    %39 = arith.index_cast %38 : i32 to index
    %c0_27 = arith.constant 0 : index
    %c0_28 = arith.constant 0 : index
    %40 = vector.load %arg2[%c0_26, %39, %c0_27, %c0_28] : memref<1x18x18x4xbf16, #tpu.memory_space<vmem>>, vector<1x8x16x4xbf16>
    %41 = vector.shape_cast %40 : vector<1x8x16x4xbf16> to vector<8x16x4xbf16>
    %42 = vector.shape_cast %41 : vector<8x16x4xbf16> to vector<128x4xbf16>
    %c0_29 = arith.constant 0 : index
    %c24 = arith.constant 24 : index
    %43 = vector.load %arg7[%c0_29, %c24] : memref<128x36xbf16, #tpu.memory_space<vmem>>, vector<128x4xbf16>
    tpu.vector_store %arg7[%c0_29, %c24], %42 {strides = array<i32>} : memref<128x36xbf16, #tpu.memory_space<vmem>>, vector<128x4xbf16>,
    %c2_i32_30 = arith.constant 2 : i32
    %44 = arith.addi %1, %c2_i32_30 : i32
    %c0_31 = arith.constant 0 : index
    %45 = arith.index_cast %44 : i32 to index
    %c1_32 = arith.constant 1 : index
    %c0_33 = arith.constant 0 : index
    %46 = vector.load %arg2[%c0_31, %45, %c1_32, %c0_33] : memref<1x18x18x4xbf16, #tpu.memory_space<vmem>>, vector<1x8x16x4xbf16>
    %47 = vector.shape_cast %46 : vector<1x8x16x4xbf16> to vector<8x16x4xbf16>
    %48 = vector.shape_cast %47 : vector<8x16x4xbf16> to vector<128x4xbf16>
    %c0_34 = arith.constant 0 : index
    %c28 = arith.constant 28 : index
    %49 = vector.load %arg7[%c0_34, %c28] : memref<128x36xbf16, #tpu.memory_space<vmem>>, vector<128x4xbf16>
    tpu.vector_store %arg7[%c0_34, %c28], %48 {strides = array<i32>} : memref<128x36xbf16, #tpu.memory_space<vmem>>, vector<128x4xbf16>,
    %c2_i32_35 = arith.constant 2 : i32
    %50 = arith.addi %1, %c2_i32_35 : i32
    %c0_36 = arith.constant 0 : index
    %51 = arith.index_cast %50 : i32 to index
    %c2_37 = arith.constant 2 : index
    %c0_38 = arith.constant 0 : index
    %52 = vector.load %arg2[%c0_36, %51, %c2_37, %c0_38] : memref<1x18x18x4xbf16, #tpu.memory_space<vmem>>, vector<1x8x16x4xbf16>
    %53 = vector.shape_cast %52 : vector<1x8x16x4xbf16> to vector<8x16x4xbf16>
    %54 = vector.shape_cast %53 : vector<8x16x4xbf16> to vector<128x4xbf16>
    %c0_39 = arith.constant 0 : index
    %c32 = arith.constant 32 : index
    %55 = vector.load %arg7[%c0_39, %c32] : memref<128x36xbf16, #tpu.memory_space<vmem>>, vector<128x4xbf16>
    tpu.vector_store %arg7[%c0_39, %c32], %54 {strides = array<i32>} : memref<128x36xbf16, #tpu.memory_space<vmem>>, vector<128x4xbf16>,
    %c0_40 = arith.constant 0 : index
    %c0_41 = arith.constant 0 : index
    %56 = vector.load %arg7[%c0_40, %c0_41] : memref<128x36xbf16, #tpu.memory_space<vmem>>, vector<128x36xbf16>
    %c0_42 = arith.constant 0 : index
    %c0_43 = arith.constant 0 : index
    %57 = vector.load %arg3[%c0_42, %c0_43] : memref<36x8xbf16, #tpu.memory_space<vmem>>, vector<36x8xbf16>
    %cst = arith.constant dense<0.000000e+00> : vector<128x8xf32>
    %58 = tpu.matmul %56, %57, %cst {dimension_numbers = #tpu.dot_dimension_numbers<[1], [0], [0], [1], [0, 0, 1, 1], [], []>} : vector<128x36xbf16>, vector<36x8xbf16>, vector<128x8xf32> -> vector<128x8xf32>
    %c0_44 = arith.constant 0 : index
    %c0_45 = arith.constant 0 : index
    %59 = vector.load %arg4[%c0_44, %c0_45] : memref<1x8xf32, #tpu.memory_space<vmem>>, vector<1x8xf32>
    %60 = vector.broadcast %59 : vector<1x8xf32> to vector<128x8xf32>
    %61 = arith.mulf %58, %60 : vector<128x8xf32>
    %c0_46 = arith.constant 0 : index
    %c0_47 = arith.constant 0 : index
    %62 = vector.load %arg5[%c0_46, %c0_47] : memref<1x8xf32, #tpu.memory_space<vmem>>, vector<1x8xf32>
    %63 = vector.broadcast %62 : vector<1x8xf32> to vector<128x8xf32>
    %64 = arith.addf %61, %63 : vector<128x8xf32>
    %cst_48 = arith.constant 0.000000e+00 : f32
    %65 = vector.broadcast %cst_48 : f32 to vector<128x8xf32>
    %66 = arith.cmpf ogt, %64, %65 : vector<128x8xf32>
    %cst_49 = arith.constant 1.000000e-01 : f32
    %67 = vector.broadcast %cst_49 : f32 to vector<128x8xf32>
    %68 = arith.mulf %67, %64 : vector<128x8xf32>
    %69 = arith.select %66, %64, %68 : vector<128x8xi1>, vector<128x8xf32>
    %70 = arith.truncf %69 : vector<128x8xf32> to vector<128x8xbf16>
    %c0_50 = arith.constant 0 : index
    %c0_51 = arith.constant 0 : index
    %c0_52 = arith.constant 0 : index
    %71 = vector.load %arg6[%c0_50, %c0_51, %c0_52] : memref<1x128x8xbf16, #tpu.memory_space<vmem>>, vector<1x128x8xbf16>
    %72 = vector.shape_cast %71 : vector<1x128x8xbf16> to vector<128x8xbf16>
    %73 = vector.shape_cast %70 : vector<128x8xbf16> to vector<1x128x8xbf16>
    tpu.vector_store %arg6[%c0_50, %c0_51, %c0_52], %73 {strides = array<i32>} : memref<1x128x8xbf16, #tpu.memory_space<vmem>>, vector<1x128x8xbf16>,
    return
  }
  func.func @transform_0(%arg0: i32, %arg1: i32) -> (i32, i32, i32, i32) {
    %c0_i32 = arith.constant 0 : i32
    %c0_i32_0 = arith.constant 0 : i32
    %c0_i32_1 = arith.constant 0 : i32
    %c0_i32_2 = arith.constant 0 : i32
    return %arg0, %c0_i32, %c0_i32_0, %c0_i32_1 : i32, i32, i32, i32
  }
  func.func @transform_1(%arg0: i32, %arg1: i32) -> (i32, i32) {
    %c0_i32 = arith.constant 0 : i32
    %c0_i32_0 = arith.constant 0 : i32
    %c0_i32_1 = arith.constant 0 : i32
    return %c0_i32, %c0_i32_0 : i32, i32
  }
  func.func @transform_2(%arg0: i32, %arg1: i32) -> (i32, i32) {
    %c0_i32 = arith.constant 0 : i32
    %c0_i32_0 = arith.constant 0 : i32
    %c0_i32_1 = arith.constant 0 : i32
    return %c0_i32, %c0_i32_0 : i32, i32
  }
  func.func @transform_3(%arg0: i32, %arg1: i32) -> (i32, i32) {
    %c0_i32 = arith.constant 0 : i32
    %c0_i32_0 = arith.constant 0 : i32
    %c0_i32_1 = arith.constant 0 : i32
    return %c0_i32, %c0_i32_0 : i32, i32
  }
  func.func @transform_4(%arg0: i32, %arg1: i32) -> (i32, i32, i32) {
    %c0_i32 = arith.constant 0 : i32
    %c0_i32_0 = arith.constant 0 : i32
    return %arg0, %arg1, %c0_i32 : i32, i32, i32
  }
}

</mosaic_0001>

<llo_original>
// kernel: conv_forward.1
$region0: #{conv_forward.1}
  #allocation0 [shape = 'u32[]', space=smem, size = 0x4, offset = 0x4, fixed_abs, tag = 'smem constant byte address 0x4 - core index']
  #allocation1 [shape = 'u32[144,128]{1,0:T(1,128)}', space=vmem, size = 0x12000, scoped, tag = 'internal scratch']
  #allocation2 [shape = 'bf16[128,36]{1,0:T(8,128)(2,1)}', space=vmem, size = 0x8000, scoped, tag = 'scratch operand']
  %s0 = inlined_call_operand.vmem [shape: bf16[2,18,18,4], index: 0, kind: input, shape index: {}]
  %s1 = inlined_call_operand.vmem [shape: bf16[36,8], index: 1, kind: input, shape index: {}]
  %s2 = inlined_call_operand.vmem [shape: f32[1,8], index: 2, kind: input, shape index: {}]
  %s3 = inlined_call_operand.vmem [shape: f32[1,8], index: 3, kind: input, shape index: {}]
  %s4 = inlined_call_operand.vmem [shape: bf16[2,256,8], index: 4, kind: output, shape index: {}]
  %s5 = sld [smem:[#allocation0]]
  $region49: #{conv_forward.1} parent=0
    _
  %s7 = ssub.s32 1, %s5
  %s8 = scalar_select 0, %s7, %s5
  loop: start=0, step=1, limit=6
  $region2: #{conv_forward.1} parent=0 // loop_pre_header
    _
  $region3: #{conv_forward.1} parent=0 // loop_header
    %s10 = sphi 0, %s14
    %p11 = scmp.ge.s32.totalorder %s10, 6
    %s17 = sphi 0, %s29
    %s18 = sphi 0, %s25
    %s19 = sphi 0, %s17
    %s20 = sphi 0, %s18
    %s21 = sphi 0, %s19
    %s22 = sphi 0, %s20
    %s32 = sphi 0, %s34
    %s35 = sphi 0, %s32
    %s36 = sphi 0, %s35
    %s52 = sphi 0, %s36
    %s56 = sphi 0, %s56
    %s58 = sphi 0, %s56
    %s59 = sphi 0, %s58
    %s73 = sphi 0, %s59
    %s77 = sphi 0, %s77
    %s79 = sphi 0, %s77
    %s80 = sphi 0, %s79
    %s94 = sphi 0, %s80
    %s98 = sphi 0, %s98
    %s100 = sphi 0, %s98
    %s101 = sphi 0, %s100
    %s115 = sphi 0, %s101
    %s123 = sphi 0, %s125
    %s126 = sphi 0, %s123
    %s127 = sphi 0, %s126
    %s143 = sphi 0, %s127
  $region4: #{conv_forward.1} parent=0 // loop_header_branch
    %13 = sbr.rel (%p11) target = $region8
  $region5: #{conv_forward.1} parent=0 // loop_body
    %s15 = ssub.s32 %s10, 1
    %s16 = ssub.s32 %s10, 2
    %s23 = sadd.s32 1, %s18
    %p24 = scmp.ge.s32.totalorder %s23, 2
    %s25 = scalar_select %p24, 0, %s23
    %s26 = sadd.s32 1, %s17
    %s27 = scalar_select %p24, %s26, %s17
    %p28 = scmp.ge.s32.totalorder %s27, 2
    %s29 = scalar_select %p28, 0, %s27
    %s30 = ssub.s32 %s17, %s29
    %p31 = scmp.eq.s32.totalorder %s30, 0
    %s33 = sadd.s32 %s32, 1
    %s34 = scalar_select %p31, %s32, %s33
    %p37 = pneg %p31
    %p38 = scmp.eq.s32.totalorder %s10, 3
    %p39 = por %p37, %p38
    %p40 = scmp.ne.s32.totalorder %s32, %s35
    %p41 = scmp.eq.s32.totalorder %s10, 0
    %p42 = por %p40, %p41
    %p43 = scmp.ne.s32.totalorder %s32, %s35
    %p44 = scmp.eq.s32.totalorder %s15, 3
    %p45 = por %p43, %p44
    %p46 = scmp.ne.s32.totalorder %s35, %s36
    %p47 = scmp.eq.s32.totalorder %s15, 0
    %p48 = por %p46, %p47
    %p49 = scmp.ne.s32.totalorder %s35, %s36
    %p50 = scmp.eq.s32.totalorder %s16, 3
    %p51 = por %p49, %p50
    %p53 = scmp.ne.s32.totalorder %s36, %s52
    %p54 = scmp.eq.s32.totalorder %s16, 0
    %p55 = por %p53, %p54
    %s57 = sadd.s32 %s56, 1
    %p60 = scmp.eq.s32.totalorder %s10, 3
    %p61 = scmp.ne.s32.totalorder %s56, %s58
    %p62 = scmp.eq.s32.totalorder %s10, 0
    %p63 = por %p61, %p62
    %p64 = scmp.ne.s32.totalorder %s56, %s58
    %p65 = scmp.eq.s32.totalorder %s15, 3
    %p66 = por %p64, %p65
    %p67 = scmp.ne.s32.totalorder %s58, %s59
    %p68 = scmp.eq.s32.totalorder %s15, 0
    %p69 = por %p67, %p68
    %p70 = scmp.ne.s32.totalorder %s58, %s59
    %p71 = scmp.eq.s32.totalorder %s16, 3
    %p72 = por %p70, %p71
    %p74 = scmp.ne.s32.totalorder %s59, %s73
    %p75 = scmp.eq.s32.totalorder %s16, 0
    %p76 = por %p74, %p75
    %s78 = sadd.s32 %s77, 1
    %p81 = scmp.eq.s32.totalorder %s10, 3
    %p82 = scmp.ne.s32.totalorder %s77, %s79
    %p83 = scmp.eq.s32.totalorder %s10, 0
    %p84 = por %p82, %p83
    %p85 = scmp.ne.s32.totalorder %s77, %s79
    %p86 = scmp.eq.s32.totalorder %s15, 3
    %p87 = por %p85, %p86
    %p88 = scmp.ne.s32.totalorder %s79, %s80
    %p89 = scmp.eq.s32.totalorder %s15, 0
    %p90 = por %p88, %p89
    %p91 = scmp.ne.s32.totalorder %s79, %s80
    %p92 = scmp.eq.s32.totalorder %s16, 3
    %p93 = por %p91, %p92
    %p95 = scmp.ne.s32.totalorder %s80, %s94
    %p96 = scmp.eq.s32.totalorder %s16, 0
    %p97 = por %p95, %p96
    %s99 = sadd.s32 %s98, 1
    %p102 = scmp.eq.s32.totalorder %s10, 3
    %p103 = scmp.ne.s32.totalorder %s98, %s100
    %p104 = scmp.eq.s32.totalorder %s10, 0
    %p105 = por %p103, %p104
    %p106 = scmp.ne.s32.totalorder %s98, %s100
    %p107 = scmp.eq.s32.totalorder %s15, 3
    %p108 = por %p106, %p107
    %p109 = scmp.ne.s32.totalorder %s100, %s101
    %p110 = scmp.eq.s32.totalorder %s15, 0
    %p111 = por %p109, %p110
    %p112 = scmp.ne.s32.totalorder %s100, %s101
    %p113 = scmp.eq.s32.totalorder %s16, 3
    %p114 = por %p112, %p113
    %p116 = scmp.ne.s32.totalorder %s101, %s115
    %p117 = scmp.eq.s32.totalorder %s16, 0
    %p118 = por %p116, %p117
    %s119 = ssub.s32 %s17, %s29
    %s120 = ssub.s32 %s18, %s25
    %s121 = sor.u32 %s119, %s120
    %p122 = scmp.eq.s32.totalorder %s121, 0
    %s124 = sadd.s32 %s123, 1
    %s125 = scalar_select %p122, %s123, %s124
    %p128 = pneg %p122
    %p129 = scmp.eq.s32.totalorder %s10, 3
    %p130 = por %p128, %p129
    %p131 = scmp.ne.s32.totalorder %s123, %s126
    %p132 = scmp.eq.s32.totalorder %s10, 0
    %p133 = por %p131, %p132
    %p134 = scmp.ne.s32.totalorder %s123, %s126
    %p135 = scmp.eq.s32.totalorder %s15, 3
    %p136 = por %p134, %p135
    %p137 = scmp.ne.s32.totalorder %s126, %s127
    %p138 = scmp.eq.s32.totalorder %s15, 0
    %p139 = por %p137, %p138
    %p140 = scmp.ne.s32.totalorder %s126, %s127
    %p141 = scmp.eq.s32.totalorder %s16, 3
    %p142 = por %p140, %p141
    %p144 = scmp.ne.s32.totalorder %s127, %s143
    %p145 = scmp.eq.s32.totalorder %s16, 0
    %p146 = por %p144, %p145
    %p147 = scmp.le.s32.totalorder 1, %s10
    %p148 = scmp.lt.s32.totalorder %s10, 5
    %p149 = pnand %p147, %p148
    %p150 = pneg %p149
    // Predicated region
    $region9: #{conv_forward.1} parent=5 // pred_check
      _
    $region10: #{conv_forward.1} parent=5 // pred_check_branch
      %152 = sbr.rel (%p149) target = $region12
    $region11: #{conv_forward.1} parent=5 // pred_region
      %s153 = ssub.s32 %s10, 1
      // Predicated region
      $region13: #{conv_forward.1} parent=11 // pred_check
        %p154 = pneg %p69
      $region14: #{conv_forward.1} parent=11 // pred_check_branch
        %156 = sbr.rel (%p154) target = $region16
      $region15: #{conv_forward.1} parent=11 // pred_region
        _
      $region16: #{conv_forward.1} parent=11 // pred_fallthru
        _
      // Predicated region
      $region17: #{conv_forward.1} parent=11 // pred_check
        %p157 = pneg %p90
      $region18: #{conv_forward.1} parent=11 // pred_check_branch
        %159 = sbr.rel (%p157) target = $region20
      $region19: #{conv_forward.1} parent=11 // pred_region
        _
      $region20: #{conv_forward.1} parent=11 // pred_fallthru
        _
      // Predicated region
      $region21: #{conv_forward.1} parent=11 // pred_check
        %p160 = pneg %p111
      $region22: #{conv_forward.1} parent=11 // pred_check_branch
        %162 = sbr.rel (%p160) target = $region24
      $region23: #{conv_forward.1} parent=11 // pred_region
        _
      $region24: #{conv_forward.1} parent=11 // pred_fallthru
        _
    $region12: #{conv_forward.1} parent=5 // pred_fallthru
      _
    %p163 = scmp.lt.s32.totalorder %s10, 4
    // Predicated region
    $region25: #{conv_forward.1} parent=5 // pred_check
      %p164 = pneg %p163
    $region26: #{conv_forward.1} parent=5 // pred_check_branch
      %166 = sbr.rel (%p164) target = $region28
    $region27: #{conv_forward.1} parent=5 // pred_region
      // Predicated region
      $region29: #{conv_forward.1} parent=27 // pred_check
        %p167 = pneg %p42
      $region30: #{conv_forward.1} parent=27 // pred_check_branch
        %169 = sbr.rel (%p167) target = $region32
      $region31: #{conv_forward.1} parent=27 // pred_region
        %p170 = scmp.lt.s32.totalorder %s17, 1
        %s171 = scalar_select %p170, %s17, 1
        %s172 = smul.addr %s171, 54
        %s173 = smul.addr %s172, 4
        %s174 = scalar_lea.vmem %s0, %s173
      $region32: #{conv_forward.1} parent=27 // pred_fallthru
        _
    $region28: #{conv_forward.1} parent=5 // pred_fallthru
      _
    %p175 = scmp.le.s32.totalorder 1, %s10
    %p176 = scmp.lt.s32.totalorder %s10, 5
    %p177 = pnand %p175, %p176
    %p178 = pneg %p177
    // Predicated region
    $region33: #{conv_forward.1} parent=5 // pred_check
      _
    $region34: #{conv_forward.1} parent=5 // pred_check_branch
      %180 = sbr.rel (%p177) target = $region36
    $region35: #{conv_forward.1} parent=5 // pred_region
      %s181 = ssub.s32 %s10, 1
      %p182 = scmp.lt.s32.totalorder %s19, 1
      %s183 = scalar_select %p182, %s19, 1
      %s184 = smul.addr %s183, 54
      %s185 = smul.addr %s184, 4
      %s186 = scalar_lea.vmem %s0, %s185
      %p187 = pneg %p48
      %p188 = pneg %p45
      %p189 = pneg %p69
      %p190 = pneg %p66
      %p191 = pneg %p90
      %p192 = pneg %p87
      %p193 = pneg %p111
      %p194 = pneg %p108
      %p195 = pneg %p139
      %p196 = pneg %p136
      %s197 = smul.u32 16, %s20
      %p198 = scmp.lt.s32.totalorder %s19, 1
      %s199 = scalar_select %p198, %s19, 1
      %p200 = scmp.lt.s32.totalorder %s197, 31
      %s201 = scalar_select %p200, %s197, 31
      %s202 = smul.addr %s199, 32
      %s203 = sadd.s32 %s201, %s202
      %s204 = smul.addr %s203, 4
      %s205 = scalar_lea.vmem %s4, %s204
      %p206 = scmp.lt.s32.totalorder %s19, 1
      %s207 = scalar_select %p206, %s19, 1
      %s208 = smul.addr %s207, 54
      %s209 = smul.addr %s208, 4
      %s210 = scalar_lea.vmem %s0, %s209
      %s211 = smul.u32 16, %s20
      %p212 = scmp.lt.s32.totalorder %s19, 1
      %s213 = scalar_select %p212, %s19, 1
      %p214 = scmp.lt.s32.totalorder %s211, 31
      %s215 = scalar_select %p214, %s211, 31
      %s216 = smul.addr %s213, 32
      %s217 = sadd.s32 %s215, %s216
      %s218 = smul.addr %s217, 4
      %s219 = scalar_lea.vmem %s4, %s218
      %s220 = smul.u32 16, %s20
      %s222 = smul.u32 %s20, 8
      %s223 = smul.u32 %s222, 3
      %s224 = smul.addr %s223, 4
      %s225 = scalar_lea.vmem %s210, %s224
      %v226 = vld [vmem:[%s225] sm:$0xf]
      %v227 = vld [vmem:[%s225 + $0x4] sm:$0xf]
      %v228 = vld [vmem:[%s225 + $0xc] sm:$0xf]
      %v229 = vld [vmem:[%s225 + $0x10] sm:$0xf]
      %v230 = vld [vmem:[%s225 + $0x18] sm:$0xf]
      %v231 = vld [vmem:[%s225 + $0x1c] sm:$0xf]
      %v232 = vld [vmem:[%s225 + $0x24] sm:$0xf]
      %v233 = vld [vmem:[%s225 + $0x28] sm:$0xf]
      %v234 = vld [vmem:[%s225 + $0x30] sm:$0xf]
      %v235 = vld [vmem:[%s225 + $0x34] sm:$0xf]
      %v236 = vld [vmem:[%s225 + $0x3c] sm:$0xf]
      %v237 = vld [vmem:[%s225 + $0x40] sm:$0xf]
      %v238 = vld [vmem:[%s225 + $0x48] sm:$0xf]
      %v239 = vld [vmem:[%s225 + $0x4c] sm:$0xf]
      %v240 = vld [vmem:[%s225 + $0x54] sm:$0xf]
      %v241 = vld [vmem:[%s225 + $0x58] sm:$0xf]
      %vm242 = vcmask 27648
      %243 = vst.msk [vmem:[#allocation2] sm:$0xf] %vm242, %v226
      %244 = vst.msk [vmem:[#allocation2 + $0x4] sm:$0xf] %vm242, %v227
      %245 = vst.msk [vmem:[#allocation2 + $0x8] sm:$0xf] %vm242, %v228
      %246 = vst.msk [vmem:[#allocation2 + $0xc] sm:$0xf] %vm242, %v229
      %247 = vst.msk [vmem:[#allocation2 + $0x10] sm:$0xf] %vm242, %v230
      %248 = vst.msk [vmem:[#allocation2 + $0x14] sm:$0xf] %vm242, %v231
      %249 = vst.msk [vmem:[#allocation2 + $0x18] sm:$0xf] %vm242, %v232
      %250 = vst.msk [vmem:[#allocation2 + $0x1c] sm:$0xf] %vm242, %v233
      %251 = vst.msk [vmem:[#allocation2 + $0x20] sm:$0xf] %vm242, %v234
      %252 = vst.msk [vmem:[#allocation2 + $0x24] sm:$0xf] %vm242, %v235
      %253 = vst.msk [vmem:[#allocation2 + $0x28] sm:$0xf] %vm242, %v236
      %254 = vst.msk [vmem:[#allocation2 + $0x2c] sm:$0xf] %vm242, %v237
      %255 = vst.msk [vmem:[#allocation2 + $0x30] sm:$0xf] %vm242, %v238
      %256 = vst.msk [vmem:[#allocation2 + $0x34] sm:$0xf] %vm242, %v239
      %257 = vst.msk [vmem:[#allocation2 + $0x38] sm:$0xf] %vm242, %v240
      %258 = vst.msk [vmem:[#allocation2 + $0x3c] sm:$0xf] %vm242, %v241
      %v259 = vld [vmem:[%s225] sm:$0xf]
      %v260 = vld [vmem:[%s225 + $0x4] sm:$0xf]
      %v261 = vld [vmem:[%s225 + $0x8] sm:$0x1]
      %v262 = vld [vmem:[%s225 + $0xc] sm:$0xf]
      %v263 = vld [vmem:[%s225 + $0x10] sm:$0xf]
      %v264 = vld [vmem:[%s225 + $0x14] sm:$0x1]
      %v265 = vld [vmem:[%s225 + $0x18] sm:$0xf]
      %v266 = vld [vmem:[%s225 + $0x1c] sm:$0xf]
      %v267 = vld [vmem:[%s225 + $0x20] sm:$0x1]
      %v268 = vld [vmem:[%s225 + $0x24] sm:$0xf]
      %v269 = vld [vmem:[%s225 + $0x28] sm:$0xf]
      %v270 = vld [vmem:[%s225 + $0x2c] sm:$0x1]
      %v271 = vld [vmem:[%s225 + $0x30] sm:$0xf]
      %v272 = vld [vmem:[%s225 + $0x34] sm:$0xf]
      %v273 = vld [vmem:[%s225 + $0x38] sm:$0x1]
      %v274 = vld [vmem:[%s225 + $0x3c] sm:$0xf]
      %v275 = vld [vmem:[%s225 + $0x40] sm:$0xf]
      %v276 = vld [vmem:[%s225 + $0x44] sm:$0x1]
      %v277 = vld [vmem:[%s225 + $0x48] sm:$0xf]
      %v278 = vld [vmem:[%s225 + $0x4c] sm:$0xf]
      %v279 = vld [vmem:[%s225 + $0x50] sm:$0x1]
      %v280 = vld [vmem:[%s225 + $0x54] sm:$0xf]
      %v281 = vld [vmem:[%s225 + $0x58] sm:$0xf]
      %v282 = vld [vmem:[%s225 + $0x5c] sm:$0x1]
      %vm283 = vsmask.f32 3328
      %vm284 = vsmask.f32 7440
      %vm285 = vmor %vm283, %vm284
      %v287 = vshrl.u32 %v259, 16
      %v289 = vrot.slane %v287, 4
      %v290 = vshll.u32 %v259, 16
      %v292 = vrot.slane %v290, 5
      %v293 = vor.u32 %v289, %v292
      %v294 = vrot.slane %v293, 4
      %v296 = vshll.u32 %v260, 16
      %v298 = vrot.slane %v296, 5
      %v299 = vsel %vm285, %v294, %v298
      %v300 = vshrl.u32 %v260, 16
      %v302 = vrot.slane %v300, 4
      %v303 = vor.u32 %v302, %v298
      %v304 = vrot.slane %v303, 4
      %v306 = vshll.u32 %v261, 16
      %v308 = vrot.slane %v306, 5
      %v309 = vsel %vm285, %v304, %v308
      %v311 = vshrl.u32 %v262, 16
      %v313 = vrot.slane %v311, 4
      %v314 = vshll.u32 %v262, 16
      %v316 = vrot.slane %v314, 5
      %v317 = vor.u32 %v313, %v316
      %v318 = vrot.slane %v317, 4
      %v320 = vshll.u32 %v263, 16
      %v322 = vrot.slane %v320, 5
      %v323 = vsel %vm285, %v318, %v322
      %v324 = vshrl.u32 %v263, 16
      %v326 = vrot.slane %v324, 4
      %v327 = vor.u32 %v326, %v322
      %v328 = vrot.slane %v327, 4
      %v330 = vshll.u32 %v264, 16
      %v332 = vrot.slane %v330, 5
      %v333 = vsel %vm285, %v328, %v332
      %v335 = vshrl.u32 %v265, 16
      %v337 = vrot.slane %v335, 4
      %v338 = vshll.u32 %v265, 16
      %v340 = vrot.slane %v338, 5
      %v341 = vor.u32 %v337, %v340
      %v342 = vrot.slane %v341, 4
      %v344 = vshll.u32 %v266, 16
      %v346 = vrot.slane %v344, 5
      %v347 = vsel %vm285, %v342, %v346
      %v348 = vshrl.u32 %v266, 16
      %v350 = vrot.slane %v348, 4
      %v351 = vor.u32 %v350, %v346
      %v352 = vrot.slane %v351, 4
      %v354 = vshll.u32 %v267, 16
      %v356 = vrot.slane %v354, 5
      %v357 = vsel %vm285, %v352, %v356
      %v359 = vshrl.u32 %v268, 16
      %v361 = vrot.slane %v359, 4
      %v362 = vshll.u32 %v268, 16
      %v364 = vrot.slane %v362, 5
      %v365 = vor.u32 %v361, %v364
      %v366 = vrot.slane %v365, 4
      %v368 = vshll.u32 %v269, 16
      %v370 = vrot.slane %v368, 5
      %v371 = vsel %vm285, %v366, %v370
      %v372 = vshrl.u32 %v269, 16
      %v374 = vrot.slane %v372, 4
      %v375 = vor.u32 %v374, %v370
      %v376 = vrot.slane %v375, 4
      %v378 = vshll.u32 %v270, 16
      %v380 = vrot.slane %v378, 5
      %v381 = vsel %vm285, %v376, %v380
      %v383 = vshrl.u32 %v271, 16
      %v385 = vrot.slane %v383, 4
      %v386 = vshll.u32 %v271, 16
      %v388 = vrot.slane %v386, 5
      %v389 = vor.u32 %v385, %v388
      %v390 = vrot.slane %v389, 4
      %v392 = vshll.u32 %v272, 16
      %v394 = vrot.slane %v392, 5
      %v395 = vsel %vm285, %v390, %v394
      %v396 = vshrl.u32 %v272, 16
      %v398 = vrot.slane %v396, 4
      %v399 = vor.u32 %v398, %v394
      %v400 = vrot.slane %v399, 4
      %v402 = vshll.u32 %v273, 16
      %v404 = vrot.slane %v402, 5
      %v405 = vsel %vm285, %v400, %v404
      %v407 = vshrl.u32 %v274, 16
      %v409 = vrot.slane %v407, 4
      %v410 = vshll.u32 %v274, 16
      %v412 = vrot.slane %v410, 5
      %v413 = vor.u32 %v409, %v412
      %v414 = vrot.slane %v413, 4
      %v416 = vshll.u32 %v275, 16
      %v418 = vrot.slane %v416, 5
      %v419 = vsel %vm285, %v414, %v418
      %v420 = vshrl.u32 %v275, 16
      %v422 = vrot.slane %v420, 4
      %v423 = vor.u32 %v422, %v418
      %v424 = vrot.slane %v423, 4
      %v426 = vshll.u32 %v276, 16
      %v428 = vrot.slane %v426, 5
      %v429 = vsel %vm285, %v424, %v428
      %v431 = vshrl.u32 %v277, 16
      %v433 = vrot.slane %v431, 4
      %v434 = vshll.u32 %v277, 16
      %v436 = vrot.slane %v434, 5
      %v437 = vor.u32 %v433, %v436
      %v438 = vrot.slane %v437, 4
      %v440 = vshll.u32 %v278, 16
      %v442 = vrot.slane %v440, 5
      %v443 = vsel %vm285, %v438, %v442
      %v444 = vshrl.u32 %v278, 16
      %v446 = vrot.slane %v444, 4
      %v447 = vor.u32 %v446, %v442
      %v448 = vrot.slane %v447, 4
      %v450 = vshll.u32 %v279, 16
      %v452 = vrot.slane %v450, 5
      %v453 = vsel %vm285, %v448, %v452
      %v455 = vshrl.u32 %v280, 16
      %v457 = vrot.slane %v455, 4
      %v458 = vshll.u32 %v280, 16
      %v460 = vrot.slane %v458, 5
      %v461 = vor.u32 %v457, %v460
      %v462 = vrot.slane %v461, 4
      %v464 = vshll.u32 %v281, 16
      %v466 = vrot.slane %v464, 5
      %v467 = vsel %vm285, %v462, %v466
      %v468 = vshrl.u32 %v281, 16
      %v470 = vrot.slane %v468, 4
      %v471 = vor.u32 %v470, %v466
      %v472 = vrot.slane %v471, 4
      %v474 = vshll.u32 %v282, 16
      %v476 = vrot.slane %v474, 5
      %v477 = vsel %vm285, %v472, %v476
      %478 = vrot.lane.b32.xlu0 %v299, 4
      %v479 = vpop.permute.xlu0 %478
      %480 = vrot.lane.b32.xlu0 %v309, 4
      %v481 = vpop.permute.xlu0 %480
      %482 = vrot.lane.b32.xlu0 %v323, 4
      %v483 = vpop.permute.xlu0 %482
      %484 = vrot.lane.b32.xlu0 %v333, 4
      %v485 = vpop.permute.xlu0 %484
      %486 = vrot.lane.b32.xlu0 %v347, 4
      %v487 = vpop.permute.xlu0 %486
      %488 = vrot.lane.b32.xlu0 %v357, 4
      %v489 = vpop.permute.xlu0 %488
      %490 = vrot.lane.b32.xlu0 %v371, 4
      %v491 = vpop.permute.xlu0 %490
      %492 = vrot.lane.b32.xlu0 %v381, 4
      %v493 = vpop.permute.xlu0 %492
      %494 = vrot.lane.b32.xlu0 %v395, 4
      %v495 = vpop.permute.xlu0 %494
      %496 = vrot.lane.b32.xlu0 %v405, 4
      %v497 = vpop.permute.xlu0 %496
      %498 = vrot.lane.b32.xlu0 %v419, 4
      %v499 = vpop.permute.xlu0 %498
      %500 = vrot.lane.b32.xlu0 %v429, 4
      %v501 = vpop.permute.xlu0 %500
      %502 = vrot.lane.b32.xlu0 %v443, 4
      %v503 = vpop.permute.xlu0 %502
      %504 = vrot.lane.b32.xlu0 %v453, 4
      %v505 = vpop.permute.xlu0 %504
      %506 = vrot.lane.b32.xlu0 %v467, 4
      %v507 = vpop.permute.xlu0 %506
      %508 = vrot.lane.b32.xlu0 %v477, 4
      %v509 = vpop.permute.xlu0 %508
      %vm526 = vcmask 60448
      %527 = vst.msk [vmem:[#allocation2] sm:$0xf] %vm526, %v479
      %528 = vst.msk [vmem:[#allocation2 + $0x4] sm:$0xf] %vm526, %v481
      %529 = vst.msk [vmem:[#allocation2 + $0x8] sm:$0xf] %vm526, %v483
      %530 = vst.msk [vmem:[#allocation2 + $0xc] sm:$0xf] %vm526, %v485
      %531 = vst.msk [vmem:[#allocation2 + $0x10] sm:$0xf] %vm526, %v487
      %532 = vst.msk [vmem:[#allocation2 + $0x14] sm:$0xf] %vm526, %v489
      %533 = vst.msk [vmem:[#allocation2 + $0x18] sm:$0xf] %vm526, %v491
      %534 = vst.msk [vmem:[#allocation2 + $0x1c] sm:$0xf] %vm526, %v493
      %535 = vst.msk [vmem:[#allocation2 + $0x20] sm:$0xf] %vm526, %v495
      %536 = vst.msk [vmem:[#allocation2 + $0x24] sm:$0xf] %vm526, %v497
      %537 = vst.msk [vmem:[#allocation2 + $0x28] sm:$0xf] %vm526, %v499
      %538 = vst.msk [vmem:[#allocation2 + $0x2c] sm:$0xf] %vm526, %v501
      %539 = vst.msk [vmem:[#allocation2 + $0x30] sm:$0xf] %vm526, %v503
      %540 = vst.msk [vmem:[#allocation2 + $0x34] sm:$0xf] %vm526, %v505
      %541 = vst.msk [vmem:[#allocation2 + $0x38] sm:$0xf] %vm526, %v507
      %542 = vst.msk [vmem:[#allocation2 + $0x3c] sm:$0xf] %vm526, %v509
      %v543 = vld [vmem:[%s225] sm:$0xe]
      %v544 = vld [vmem:[%s225 + $0x4] sm:$0xf]
      %v545 = vld [vmem:[%s225 + $0x8] sm:$0x1]
      %v546 = vld [vmem:[%s225 + $0xc] sm:$0xe]
      %v547 = vld [vmem:[%s225 + $0x10] sm:$0xf]
      %v548 = vld [vmem:[%s225 + $0x14] sm:$0x1]
      %v549 = vld [vmem:[%s225 + $0x18] sm:$0xe]
      %v550 = vld [vmem:[%s225 + $0x1c] sm:$0xf]
      %v551 = vld [vmem:[%s225 + $0x20] sm:$0x1]
      %v552 = vld [vmem:[%s225 + $0x24] sm:$0xe]
      %v553 = vld [vmem:[%s225 + $0x28] sm:$0xf]
      %v554 = vld [vmem:[%s225 + $0x2c] sm:$0x1]
      %v555 = vld [vmem:[%s225 + $0x30] sm:$0xe]
      %v556 = vld [vmem:[%s225 + $0x34] sm:$0xf]
      %v557 = vld [vmem:[%s225 + $0x38] sm:$0x1]
      %v558 = vld [vmem:[%s225 + $0x3c] sm:$0xe]
      %v559 = vld [vmem:[%s225 + $0x40] sm:$0xf]
      %v560 = vld [vmem:[%s225 + $0x44] sm:$0x1]
      %v561 = vld [vmem:[%s225 + $0x48] sm:$0xe]
      %v562 = vld [vmem:[%s225 + $0x4c] sm:$0xf]
      %v563 = vld [vmem:[%s225 + $0x50] sm:$0x1]
      %v564 = vld [vmem:[%s225 + $0x54] sm:$0xe]
      %v565 = vld [vmem:[%s225 + $0x58] sm:$0xf]
      %v566 = vld [vmem:[%s225 + $0x5c] sm:$0x1]
      %vm591 = vcmask 1042432
      %vm592 = vcmask 1046532
      %vm593 = vmor %vm591, %vm592
      %v594 = vrot.slane %v543, 5
      %v595 = vrot.slane %v594, 4
      %v596 = vrot.slane %v544, 5
      %v597 = vsel %vm593, %v595, %v596
      %v598 = vrot.slane %v596, 4
      %v599 = vrot.slane %v545, 5
      %v600 = vsel %vm593, %v598, %v599
      %v601 = vrot.slane %v546, 5
      %v602 = vrot.slane %v601, 4
      %v603 = vrot.slane %v547, 5
      %v604 = vsel %vm593, %v602, %v603
      %v605 = vrot.slane %v603, 4
      %v606 = vrot.slane %v548, 5
      %v607 = vsel %vm593, %v605, %v606
      %v608 = vrot.slane %v549, 5
      %v609 = vrot.slane %v608, 4
      %v610 = vrot.slane %v550, 5
      %v611 = vsel %vm593, %v609, %v610
      %v612 = vrot.slane %v610, 4
      %v613 = vrot.slane %v551, 5
      %v614 = vsel %vm593, %v612, %v613
      %v615 = vrot.slane %v552, 5
      %v616 = vrot.slane %v615, 4
      %v617 = vrot.slane %v553, 5
      %v618 = vsel %vm593, %v616, %v617
      %v619 = vrot.slane %v617, 4
      %v620 = vrot.slane %v554, 5
      %v621 = vsel %vm593, %v619, %v620
      %v622 = vrot.slane %v555, 5
      %v623 = vrot.slane %v622, 4
      %v624 = vrot.slane %v556, 5
      %v625 = vsel %vm593, %v623, %v624
      %v626 = vrot.slane %v624, 4
      %v627 = vrot.slane %v557, 5
      %v628 = vsel %vm593, %v626, %v627
      %v629 = vrot.slane %v558, 5
      %v630 = vrot.slane %v629, 4
      %v631 = vrot.slane %v559, 5
      %v632 = vsel %vm593, %v630, %v631
      %v633 = vrot.slane %v631, 4
      %v634 = vrot.slane %v560, 5
      %v635 = vsel %vm593, %v633, %v634
      %v636 = vrot.slane %v561, 5
      %v637 = vrot.slane %v636, 4
      %v638 = vrot.slane %v562, 5
      %v639 = vsel %vm593, %v637, %v638
      %v640 = vrot.slane %v638, 4
      %v641 = vrot.slane %v563, 5
      %v642 = vsel %vm593, %v640, %v641
      %v643 = vrot.slane %v564, 5
      %v644 = vrot.slane %v643, 4
      %v645 = vrot.slane %v565, 5
      %v646 = vsel %vm593, %v644, %v645
      %v647 = vrot.slane %v645, 4
      %v648 = vrot.slane %v566, 5
      %v649 = vsel %vm593, %v647, %v648
      %650 = vrot.lane.b32.xlu0 %v597, 8
      %v651 = vpop.permute.xlu0 %650
      %652 = vrot.lane.b32.xlu0 %v600, 8
      %v653 = vpop.permute.xlu0 %652
      %654 = vrot.lane.b32.xlu0 %v604, 8
      %v655 = vpop.permute.xlu0 %654
      %656 = vrot.lane.b32.xlu0 %v607, 8
      %v657 = vpop.permute.xlu0 %656
      %658 = vrot.lane.b32.xlu0 %v611, 8
      %v659 = vpop.permute.xlu0 %658
      %660 = vrot.lane.b32.xlu0 %v614, 8
      %v661 = vpop.permute.xlu0 %660
      %662 = vrot.lane.b32.xlu0 %v618, 8
      %v663 = vpop.permute.xlu0 %662
      %664 = vrot.lane.b32.xlu0 %v621, 8
      %v665 = vpop.permute.xlu0 %664
      %666 = vrot.lane.b32.xlu0 %v625, 8
      %v667 = vpop.permute.xlu0 %666
      %668 = vrot.lane.b32.xlu0 %v628, 8
      %v669 = vpop.permute.xlu0 %668
      %670 = vrot.lane.b32.xlu0 %v632, 8
      %v671 = vpop.permute.xlu0 %670
      %672 = vrot.lane.b32.xlu0 %v635, 8
      %v673 = vpop.permute.xlu0 %672
      %674 = vrot.lane.b32.xlu0 %v639, 8
      %v675 = vpop.permute.xlu0 %674
      %676 = vrot.lane.b32.xlu0 %v642, 8
      %v677 = vpop.permute.xlu0 %676
      %678 = vrot.lane.b32.xlu0 %v646, 8
      %v679 = vpop.permute.xlu0 %678
      %680 = vrot.lane.b32.xlu0 %v649, 8
      %v681 = vpop.permute.xlu0 %680
      %vm698 = vcmask 93248
      %699 = vst.msk [vmem:[#allocation2] sm:$0xf] %vm698, %v651
      %700 = vst.msk [vmem:[#allocation2 + $0x4] sm:$0xf] %vm698, %v653
      %701 = vst.msk [vmem:[#allocation2 + $0x8] sm:$0xf] %vm698, %v655
      %702 = vst.msk [vmem:[#allocation2 + $0xc] sm:$0xf] %vm698, %v657
      %703 = vst.msk [vmem:[#allocation2 + $0x10] sm:$0xf] %vm698, %v659
      %704 = vst.msk [vmem:[#allocation2 + $0x14] sm:$0xf] %vm698, %v661
      %705 = vst.msk [vmem:[#allocation2 + $0x18] sm:$0xf] %vm698, %v663
      %706 = vst.msk [vmem:[#allocation2 + $0x1c] sm:$0xf] %vm698, %v665
      %707 = vst.msk [vmem:[#allocation2 + $0x20] sm:$0xf] %vm698, %v667
      %708 = vst.msk [vmem:[#allocation2 + $0x24] sm:$0xf] %vm698, %v669
      %709 = vst.msk [vmem:[#allocation2 + $0x28] sm:$0xf] %vm698, %v671
      %710 = vst.msk [vmem:[#allocation2 + $0x2c] sm:$0xf] %vm698, %v673
      %711 = vst.msk [vmem:[#allocation2 + $0x30] sm:$0xf] %vm698, %v675
      %712 = vst.msk [vmem:[#allocation2 + $0x34] sm:$0xf] %vm698, %v677
      %713 = vst.msk [vmem:[#allocation2 + $0x38] sm:$0xf] %vm698, %v679
      %714 = vst.msk [vmem:[#allocation2 + $0x3c] sm:$0xf] %vm698, %v681
      %s715 = sadd.s32 %s222, 1
      %s716 = smul.u32 %s715, 3
      %s717 = smul.addr %s716, 4
      %s718 = scalar_lea.vmem %s210, %s717
      %v719 = vld [vmem:[%s718] sm:$0xf]
      %v720 = vld [vmem:[%s718 + $0x4] sm:$0xf]
      %v721 = vld [vmem:[%s718 + $0xc] sm:$0xf]
      %v722 = vld [vmem:[%s718 + $0x10] sm:$0xf]
      %v723 = vld [vmem:[%s718 + $0x18] sm:$0xf]
      %v724 = vld [vmem:[%s718 + $0x1c] sm:$0xf]
      %v725 = vld [vmem:[%s718 + $0x24] sm:$0xf]
      %v726 = vld [vmem:[%s718 + $0x28] sm:$0xf]
      %v727 = vld [vmem:[%s718 + $0x30] sm:$0xf]
      %v728 = vld [vmem:[%s718 + $0x34] sm:$0xf]
      %v729 = vld [vmem:[%s718 + $0x3c] sm:$0xf]
      %v730 = vld [vmem:[%s718 + $0x40] sm:$0xf]
      %v731 = vld [vmem:[%s718 + $0x48] sm:$0xf]
      %v732 = vld [vmem:[%s718 + $0x4c] sm:$0xf]
      %v733 = vld [vmem:[%s718 + $0x54] sm:$0xf]
      %v734 = vld [vmem:[%s718 + $0x58] sm:$0xf]
      %751 = vrot.lane.b32.xlu0 %v719, 12
      %v752 = vpop.permute.xlu0 %751
      %753 = vrot.lane.b32.xlu0 %v720, 12
      %v754 = vpop.permute.xlu0 %753
      %755 = vrot.lane.b32.xlu0 %v721, 12
      %v756 = vpop.permute.xlu0 %755
      %757 = vrot.lane.b32.xlu0 %v722, 12
      %v758 = vpop.permute.xlu0 %757
      %759 = vrot.lane.b32.xlu0 %v723, 12
      %v760 = vpop.permute.xlu0 %759
      %761 = vrot.lane.b32.xlu0 %v724, 12
      %v762 = vpop.permute.xlu0 %761
      %763 = vrot.lane.b32.xlu0 %v725, 12
      %v764 = vpop.permute.xlu0 %763
      %765 = vrot.lane.b32.xlu0 %v726, 12
      %v766 = vpop.permute.xlu0 %765
      %767 = vrot.lane.b32.xlu0 %v727, 12
      %v768 = vpop.permute.xlu0 %767
      %769 = vrot.lane.b32.xlu0 %v728, 12
      %v770 = vpop.permute.xlu0 %769
      %771 = vrot.lane.b32.xlu0 %v729, 12
      %v772 = vpop.permute.xlu0 %771
      %773 = vrot.lane.b32.xlu0 %v730, 12
      %v774 = vpop.permute.xlu0 %773
      %775 = vrot.lane.b32.xlu0 %v731, 12
      %v776 = vpop.permute.xlu0 %775
      %777 = vrot.lane.b32.xlu0 %v732, 12
      %v778 = vpop.permute.xlu0 %777
      %779 = vrot.lane.b32.xlu0 %v733, 12
      %v780 = vpop.permute.xlu0 %779
      %781 = vrot.lane.b32.xlu0 %v734, 12
      %v782 = vpop.permute.xlu0 %781
      %vm799 = vcmask 126048
      %800 = vst.msk [vmem:[#allocation2] sm:$0xf] %vm799, %v752
      %801 = vst.msk [vmem:[#allocation2 + $0x4] sm:$0xf] %vm799, %v754
      %802 = vst.msk [vmem:[#allocation2 + $0x8] sm:$0xf] %vm799, %v756
      %803 = vst.msk [vmem:[#allocation2 + $0xc] sm:$0xf] %vm799, %v758
      %804 = vst.msk [vmem:[#allocation2 + $0x10] sm:$0xf] %vm799, %v760
      %805 = vst.msk [vmem:[#allocation2 + $0x14] sm:$0xf] %vm799, %v762
      %806 = vst.msk [vmem:[#allocation2 + $0x18] sm:$0xf] %vm799, %v764
      %807 = vst.msk [vmem:[#allocation2 + $0x1c] sm:$0xf] %vm799, %v766
      %808 = vst.msk [vmem:[#allocation2 + $0x20] sm:$0xf] %vm799, %v768
      %809 = vst.msk [vmem:[#allocation2 + $0x24] sm:$0xf] %vm799, %v770
      %810 = vst.msk [vmem:[#allocation2 + $0x28] sm:$0xf] %vm799, %v772
      %811 = vst.msk [vmem:[#allocation2 + $0x2c] sm:$0xf] %vm799, %v774
      %812 = vst.msk [vmem:[#allocation2 + $0x30] sm:$0xf] %vm799, %v776
      %813 = vst.msk [vmem:[#allocation2 + $0x34] sm:$0xf] %vm799, %v778
      %814 = vst.msk [vmem:[#allocation2 + $0x38] sm:$0xf] %vm799, %v780
      %815 = vst.msk [vmem:[#allocation2 + $0x3c] sm:$0xf] %vm799, %v782
      %v816 = vld [vmem:[%s718] sm:$0xf]
      %v817 = vld [vmem:[%s718 + $0x4] sm:$0xf]
      %v818 = vld [vmem:[%s718 + $0x8] sm:$0x1]
      %v819 = vld [vmem:[%s718 + $0xc] sm:$0xf]
      %v820 = vld [vmem:[%s718 + $0x10] sm:$0xf]
      %v821 = vld [vmem:[%s718 + $0x14] sm:$0x1]
      %v822 = vld [vmem:[%s718 + $0x18] sm:$0xf]
      %v823 = vld [vmem:[%s718 + $0x1c] sm:$0xf]
      %v824 = vld [vmem:[%s718 + $0x20] sm:$0x1]
      %v825 = vld [vmem:[%s718 + $0x24] sm:$0xf]
      %v826 = vld [vmem:[%s718 + $0x28] sm:$0xf]
      %v827 = vld [vmem:[%s718 + $0x2c] sm:$0x1]
      %v828 = vld [vmem:[%s718 + $0x30] sm:$0xf]
      %v829 = vld [vmem:[%s718 + $0x34] sm:$0xf]
      %v830 = vld [vmem:[%s718 + $0x38] sm:$0x1]
      %v831 = vld [vmem:[%s718 + $0x3c] sm:$0xf]
      %v832 = vld [vmem:[%s718 + $0x40] sm:$0xf]
      %v833 = vld [vmem:[%s718 + $0x44] sm:$0x1]
      %v834 = vld [vmem:[%s718 + $0x48] sm:$0xf]
      %v835 = vld [vmem:[%s718 + $0x4c] sm:$0xf]
      %v836 = vld [vmem:[%s718 + $0x50] sm:$0x1]
      %v837 = vld [vmem:[%s718 + $0x54] sm:$0xf]
      %v838 = vld [vmem:[%s718 + $0x58] sm:$0xf]
      %v839 = vld [vmem:[%s718 + $0x5c] sm:$0x1]
      %v841 = vshrl.u32 %v816, 16
      %v843 = vrot.slane %v841, 4
      %v844 = vshll.u32 %v816, 16
      %v846 = vrot.slane %v844, 5
      %v847 = vor.u32 %v843, %v846
      %v848 = vrot.slane %v847, 4
      %v850 = vshll.u32 %v817, 16
      %v852 = vrot.slane %v850, 5
      %v853 = vsel %vm285, %v848, %v852
      %v854 = vshrl.u32 %v817, 16
      %v856 = vrot.slane %v854, 4
      %v857 = vor.u32 %v856, %v852
      %v858 = vrot.slane %v857, 4
      %v860 = vshll.u32 %v818, 16
      %v862 = vrot.slane %v860, 5
      %v863 = vsel %vm285, %v858, %v862
      %v865 = vshrl.u32 %v819, 16
      %v867 = vrot.slane %v865, 4
      %v868 = vshll.u32 %v819, 16
      %v870 = vrot.slane %v868, 5
      %v871 = vor.u32 %v867, %v870
      %v872 = vrot.slane %v871, 4
      %v874 = vshll.u32 %v820, 16
      %v876 = vrot.slane %v874, 5
      %v877 = vsel %vm285, %v872, %v876
      %v878 = vshrl.u32 %v820, 16
      %v880 = vrot.slane %v878, 4
      %v881 = vor.u32 %v880, %v876
      %v882 = vrot.slane %v881, 4
      %v884 = vshll.u32 %v821, 16
      %v886 = vrot.slane %v884, 5
      %v887 = vsel %vm285, %v882, %v886
      %v889 = vshrl.u32 %v822, 16
      %v891 = vrot.slane %v889, 4
      %v892 = vshll.u32 %v822, 16
      %v894 = vrot.slane %v892, 5
      %v895 = vor.u32 %v891, %v894
      %v896 = vrot.slane %v895, 4
      %v898 = vshll.u32 %v823, 16
      %v900 = vrot.slane %v898, 5
      %v901 = vsel %vm285, %v896, %v900
      %v902 = vshrl.u32 %v823, 16
      %v904 = vrot.slane %v902, 4
      %v905 = vor.u32 %v904, %v900
      %v906 = vrot.slane %v905, 4
      %v908 = vshll.u32 %v824, 16
      %v910 = vrot.slane %v908, 5
      %v911 = vsel %vm285, %v906, %v910
      %v913 = vshrl.u32 %v825, 16
      %v915 = vrot.slane %v913, 4
      %v916 = vshll.u32 %v825, 16
      %v918 = vrot.slane %v916, 5
      %v919 = vor.u32 %v915, %v918
      %v920 = vrot.slane %v919, 4
      %v922 = vshll.u32 %v826, 16
      %v924 = vrot.slane %v922, 5
      %v925 = vsel %vm285, %v920, %v924
      %v926 = vshrl.u32 %v826, 16
      %v928 = vrot.slane %v926, 4
      %v929 = vor.u32 %v928, %v924
      %v930 = vrot.slane %v929, 4
      %v932 = vshll.u32 %v827, 16
      %v934 = vrot.slane %v932, 5
      %v935 = vsel %vm285, %v930, %v934
      %v937 = vshrl.u32 %v828, 16
      %v939 = vrot.slane %v937, 4
      %v940 = vshll.u32 %v828, 16
      %v942 = vrot.slane %v940, 5
      %v943 = vor.u32 %v939, %v942
      %v944 = vrot.slane %v943, 4
      %v946 = vshll.u32 %v829, 16
      %v948 = vrot.slane %v946, 5
      %v949 = vsel %vm285, %v944, %v948
      %v950 = vshrl.u32 %v829, 16
      %v952 = vrot.slane %v950, 4
      %v953 = vor.u32 %v952, %v948
      %v954 = vrot.slane %v953, 4
      %v956 = vshll.u32 %v830, 16
      %v958 = vrot.slane %v956, 5
      %v959 = vsel %vm285, %v954, %v958
      %v961 = vshrl.u32 %v831, 16
      %v963 = vrot.slane %v961, 4
      %v964 = vshll.u32 %v831, 16
      %v966 = vrot.slane %v964, 5
      %v967 = vor.u32 %v963, %v966
      %v968 = vrot.slane %v967, 4
      %v970 = vshll.u32 %v832, 16
      %v972 = vrot.slane %v970, 5
      %v973 = vsel %vm285, %v968, %v972
      %v974 = vshrl.u32 %v832, 16
      %v976 = vrot.slane %v974, 4
      %v977 = vor.u32 %v976, %v972
      %v978 = vrot.slane %v977, 4
      %v980 = vshll.u32 %v833, 16
      %v982 = vrot.slane %v980, 5
      %v983 = vsel %vm285, %v978, %v982
      %v985 = vshrl.u32 %v834, 16
      %v987 = vrot.slane %v985, 4
      %v988 = vshll.u32 %v834, 16
      %v990 = vrot.slane %v988, 5
      %v991 = vor.u32 %v987, %v990
      %v992 = vrot.slane %v991, 4
      %v994 = vshll.u32 %v835, 16
      %v996 = vrot.slane %v994, 5
      %v997 = vsel %vm285, %v992, %v996
      %v998 = vshrl.u32 %v835, 16
      %v1000 = vrot.slane %v998, 4
      %v1001 = vor.u32 %v1000, %v996
      %v1002 = vrot.slane %v1001, 4
      %v1004 = vshll.u32 %v836, 16
      %v1006 = vrot.slane %v1004, 5
      %v1007 = vsel %vm285, %v1002, %v1006
      %v1009 = vshrl.u32 %v837, 16
      %v1011 = vrot.slane %v1009, 4
      %v1012 = vshll.u32 %v837, 16
      %v1014 = vrot.slane %v1012, 5
      %v1015 = vor.u32 %v1011, %v1014
      %v1016 = vrot.slane %v1015, 4
      %v1018 = vshll.u32 %v838, 16
      %v1020 = vrot.slane %v1018, 5
      %v1021 = vsel %vm285, %v1016, %v1020
      %v1022 = vshrl.u32 %v838, 16
      %v1024 = vrot.slane %v1022, 4
      %v1025 = vor.u32 %v1024, %v1020
      %v1026 = vrot.slane %v1025, 4
      %v1028 = vshll.u32 %v839, 16
      %v1030 = vrot.slane %v1028, 5
      %v1031 = vsel %vm285, %v1026, %v1030
      %1032 = vrot.lane.b32.xlu0 %v853, 16
      %v1033 = vpop.permute.xlu0 %1032
      %1034 = vrot.lane.b32.xlu0 %v863, 16
      %v1035 = vpop.permute.xlu0 %1034
      %1036 = vrot.lane.b32.xlu0 %v877, 16
      %v1037 = vpop.permute.xlu0 %1036
      %1038 = vrot.lane.b32.xlu0 %v887, 16
      %v1039 = vpop.permute.xlu0 %1038
      %1040 = vrot.lane.b32.xlu0 %v901, 16
      %v1041 = vpop.permute.xlu0 %1040
      %1042 = vrot.lane.b32.xlu0 %v911, 16
      %v1043 = vpop.permute.xlu0 %1042
      %1044 = vrot.lane.b32.xlu0 %v925, 16
      %v1045 = vpop.permute.xlu0 %1044
      %1046 = vrot.lane.b32.xlu0 %v935, 16
      %v1047 = vpop.permute.xlu0 %1046
      %1048 = vrot.lane.b32.xlu0 %v949, 16
      %v1049 = vpop.permute.xlu0 %1048
      %1050 = vrot.lane.b32.xlu0 %v959, 16
      %v1051 = vpop.permute.xlu0 %1050
      %1052 = vrot.lane.b32.xlu0 %v973, 16
      %v1053 = vpop.permute.xlu0 %1052
      %1054 = vrot.lane.b32.xlu0 %v983, 16
      %v1055 = vpop.permute.xlu0 %1054
      %1056 = vrot.lane.b32.xlu0 %v997, 16
      %v1057 = vpop.permute.xlu0 %1056
      %1058 = vrot.lane.b32.xlu0 %v1007, 16
      %v1059 = vpop.permute.xlu0 %1058
      %1060 = vrot.lane.b32.xlu0 %v1021, 16
      %v1061 = vpop.permute.xlu0 %1060
      %1062 = vrot.lane.b32.xlu0 %v1031, 16
      %v1063 = vpop.permute.xlu0 %1062
      %vm1080 = vcmask 158848
      %1081 = vst.msk [vmem:[#allocation2] sm:$0xf] %vm1080, %v1033
      %1082 = vst.msk [vmem:[#allocation2 + $0x4] sm:$0xf] %vm1080, %v1035
      %1083 = vst.msk [vmem:[#allocation2 + $0x8] sm:$0xf] %vm1080, %v1037
      %1084 = vst.msk [vmem:[#allocation2 + $0xc] sm:$0xf] %vm1080, %v1039
      %1085 = vst.msk [vmem:[#allocation2 + $0x10] sm:$0xf] %vm1080, %v1041
      %1086 = vst.msk [vmem:[#allocation2 + $0x14] sm:$0xf] %vm1080, %v1043
      %1087 = vst.msk [vmem:[#allocation2 + $0x18] sm:$0xf] %vm1080, %v1045
      %1088 = vst.msk [vmem:[#allocation2 + $0x1c] sm:$0xf] %vm1080, %v1047
      %1089 = vst.msk [vmem:[#allocation2 + $0x20] sm:$0xf] %vm1080, %v1049
      %1090 = vst.msk [vmem:[#allocation2 + $0x24] sm:$0xf] %vm1080, %v1051
      %1091 = vst.msk [vmem:[#allocation2 + $0x28] sm:$0xf] %vm1080, %v1053
      %1092 = vst.msk [vmem:[#allocation2 + $0x2c] sm:$0xf] %vm1080, %v1055
      %1093 = vst.msk [vmem:[#allocation2 + $0x30] sm:$0xf] %vm1080, %v1057
      %1094 = vst.msk [vmem:[#allocation2 + $0x34] sm:$0xf] %vm1080, %v1059
      %1095 = vst.msk [vmem:[#allocation2 + $0x38] sm:$0xf] %vm1080, %v1061
      %1096 = vst.msk [vmem:[#allocation2 + $0x3c] sm:$0xf] %vm1080, %v1063
      %v1097 = vld [vmem:[%s718] sm:$0xe]
      %v1098 = vld [vmem:[%s718 + $0x4] sm:$0xf]
      %v1099 = vld [vmem:[%s718 + $0x8] sm:$0x1]
      %v1100 = vld [vmem:[%s718 + $0xc] sm:$0xe]
      %v1101 = vld [vmem:[%s718 + $0x10] sm:$0xf]
      %v1102 = vld [vmem:[%s718 + $0x14] sm:$0x1]
      %v1103 = vld [vmem:[%s718 + $0x18] sm:$0xe]
      %v1104 = vld [vmem:[%s718 + $0x1c] sm:$0xf]
      %v1105 = vld [vmem:[%s718 + $0x20] sm:$0x1]
      %v1106 = vld [vmem:[%s718 + $0x24] sm:$0xe]
      %v1107 = vld [vmem:[%s718 + $0x28] sm:$0xf]
      %v1108 = vld [vmem:[%s718 + $0x2c] sm:$0x1]
      %v1109 = vld [vmem:[%s718 + $0x30] sm:$0xe]
      %v1110 = vld [vmem:[%s718 + $0x34] sm:$0xf]
      %v1111 = vld [vmem:[%s718 + $0x38] sm:$0x1]
      %v1112 = vld [vmem:[%s718 + $0x3c] sm:$0xe]
      %v1113 = vld [vmem:[%s718 + $0x40] sm:$0xf]
      %v1114 = vld [vmem:[%s718 + $0x44] sm:$0x1]
      %v1115 = vld [vmem:[%s718 + $0x48] sm:$0xe]
      %v1116 = vld [vmem:[%s718 + $0x4c] sm:$0xf]
      %v1117 = vld [vmem:[%s718 + $0x50] sm:$0x1]
      %v1118 = vld [vmem:[%s718 + $0x54] sm:$0xe]
      %v1119 = vld [vmem:[%s718 + $0x58] sm:$0xf]
      %v1120 = vld [vmem:[%s718 + $0x5c] sm:$0x1]
      %v1145 = vrot.slane %v1097, 5
      %v1146 = vrot.slane %v1145, 4
      %v1147 = vrot.slane %v1098, 5
      %v1148 = vsel %vm593, %v1146, %v1147
      %v1149 = vrot.slane %v1147, 4
      %v1150 = vrot.slane %v1099, 5
      %v1151 = vsel %vm593, %v1149, %v1150
      %v1152 = vrot.slane %v1100, 5
      %v1153 = vrot.slane %v1152, 4
      %v1154 = vrot.slane %v1101, 5
      %v1155 = vsel %vm593, %v1153, %v1154
      %v1156 = vrot.slane %v1154, 4
      %v1157 = vrot.slane %v1102, 5
      %v1158 = vsel %vm593, %v1156, %v1157
      %v1159 = vrot.slane %v1103, 5
      %v1160 = vrot.slane %v1159, 4
      %v1161 = vrot.slane %v1104, 5
      %v1162 = vsel %vm593, %v1160, %v1161
      %v1163 = vrot.slane %v1161, 4
      %v1164 = vrot.slane %v1105, 5
      %v1165 = vsel %vm593, %v1163, %v1164
      %v1166 = vrot.slane %v1106, 5
      %v1167 = vrot.slane %v1166, 4
      %v1168 = vrot.slane %v1107, 5
      %v1169 = vsel %vm593, %v1167, %v1168
      %v1170 = vrot.slane %v1168, 4
      %v1171 = vrot.slane %v1108, 5
      %v1172 = vsel %vm593, %v1170, %v1171
      %v1173 = vrot.slane %v1109, 5
      %v1174 = vrot.slane %v1173, 4
      %v1175 = vrot.slane %v1110, 5
      %v1176 = vsel %vm593, %v1174, %v1175
      %v1177 = vrot.slane %v1175, 4
      %v1178 = vrot.slane %v1111, 5
      %v1179 = vsel %vm593, %v1177, %v1178
      %v1180 = vrot.slane %v1112, 5
      %v1181 = vrot.slane %v1180, 4
      %v1182 = vrot.slane %v1113, 5
      %v1183 = vsel %vm593, %v1181, %v1182
      %v1184 = vrot.slane %v1182, 4
      %v1185 = vrot.slane %v1114, 5
      %v1186 = vsel %vm593, %v1184, %v1185
      %v1187 = vrot.slane %v1115, 5
      %v1188 = vrot.slane %v1187, 4
      %v1189 = vrot.slane %v1116, 5
      %v1190 = vsel %vm593, %v1188, %v1189
      %v1191 = vrot.slane %v1189, 4
      %v1192 = vrot.slane %v1117, 5
      %v1193 = vsel %vm593, %v1191, %v1192
      %v1194 = vrot.slane %v1118, 5
      %v1195 = vrot.slane %v1194, 4
      %v1196 = vrot.slane %v1119, 5
      %v1197 = vsel %vm593, %v1195, %v1196
      %v1198 = vrot.slane %v1196, 4
      %v1199 = vrot.slane %v1120, 5
      %v1200 = vsel %vm593, %v1198, %v1199
      %1201 = vrot.lane.b32.xlu0 %v1148, 20
      %v1202 = vpop.permute.xlu0 %1201
      %1203 = vrot.lane.b32.xlu0 %v1151, 20
      %v1204 = vpop.permute.xlu0 %1203
      %1205 = vrot.lane.b32.xlu0 %v1155, 20
      %v1206 = vpop.permute.xlu0 %1205
      %1207 = vrot.lane.b32.xlu0 %v1158, 20
      %v1208 = vpop.permute.xlu0 %1207
      %1209 = vrot.lane.b32.xlu0 %v1162, 20
      %v1210 = vpop.permute.xlu0 %1209
      %1211 = vrot.lane.b32.xlu0 %v1165, 20
      %v1212 = vpop.permute.xlu0 %1211
      %1213 = vrot.lane.b32.xlu0 %v1169, 20
      %v1214 = vpop.permute.xlu0 %1213
      %1215 = vrot.lane.b32.xlu0 %v1172, 20
      %v1216 = vpop.permute.xlu0 %1215
      %1217 = vrot.lane.b32.xlu0 %v1176, 20
      %v1218 = vpop.permute.xlu0 %1217
      %1219 = vrot.lane.b32.xlu0 %v1179, 20
      %v1220 = vpop.permute.xlu0 %1219
      %1221 = vrot.lane.b32.xlu0 %v1183, 20
      %v1222 = vpop.permute.xlu0 %1221
      %1223 = vrot.lane.b32.xlu0 %v1186, 20
      %v1224 = vpop.permute.xlu0 %1223
      %1225 = vrot.lane.b32.xlu0 %v1190, 20
      %v1226 = vpop.permute.xlu0 %1225
      %1227 = vrot.lane.b32.xlu0 %v1193, 20
      %v1228 = vpop.permute.xlu0 %1227
      %1229 = vrot.lane.b32.xlu0 %v1197, 20
      %v1230 = vpop.permute.xlu0 %1229
      %1231 = vrot.lane.b32.xlu0 %v1200, 20
      %v1232 = vpop.permute.xlu0 %1231
      %vm1249 = vcmask 191648
      %1250 = vst.msk [vmem:[#allocation2] sm:$0xf] %vm1249, %v1202
      %1251 = vst.msk [vmem:[#allocation2 + $0x4] sm:$0xf] %vm1249, %v1204
      %1252 = vst.msk [vmem:[#allocation2 + $0x8] sm:$0xf] %vm1249, %v1206
      %1253 = vst.msk [vmem:[#allocation2 + $0xc] sm:$0xf] %vm1249, %v1208
      %1254 = vst.msk [vmem:[#allocation2 + $0x10] sm:$0xf] %vm1249, %v1210
      %1255 = vst.msk [vmem:[#allocation2 + $0x14] sm:$0xf] %vm1249, %v1212
      %1256 = vst.msk [vmem:[#allocation2 + $0x18] sm:$0xf] %vm1249, %v1214
      %1257 = vst.msk [vmem:[#allocation2 + $0x1c] sm:$0xf] %vm1249, %v1216
      %1258 = vst.msk [vmem:[#allocation2 + $0x20] sm:$0xf] %vm1249, %v1218
      %1259 = vst.msk [vmem:[#allocation2 + $0x24] sm:$0xf] %vm1249, %v1220
      %1260 = vst.msk [vmem:[#allocation2 + $0x28] sm:$0xf] %vm1249, %v1222
      %1261 = vst.msk [vmem:[#allocation2 + $0x2c] sm:$0xf] %vm1249, %v1224
      %1262 = vst.msk [vmem:[#allocation2 + $0x30] sm:$0xf] %vm1249, %v1226
      %1263 = vst.msk [vmem:[#allocation2 + $0x34] sm:$0xf] %vm1249, %v1228
      %1264 = vst.msk [vmem:[#allocation2 + $0x38] sm:$0xf] %vm1249, %v1230
      %1265 = vst.msk [vmem:[#allocation2 + $0x3c] sm:$0xf] %vm1249, %v1232
      %s1266 = sadd.s32 %s222, 2
      %s1267 = smul.u32 %s1266, 3
      %s1268 = smul.addr %s1267, 4
      %s1269 = scalar_lea.vmem %s210, %s1268
      %v1270 = vld [vmem:[%s1269] sm:$0xf]
      %v1271 = vld [vmem:[%s1269 + $0x4] sm:$0xf]
      %v1272 = vld [vmem:[%s1269 + $0xc] sm:$0xf]
      %v1273 = vld [vmem:[%s1269 + $0x10] sm:$0xf]
      %v1274 = vld [vmem:[%s1269 + $0x18] sm:$0xf]
      %v1275 = vld [vmem:[%s1269 + $0x1c] sm:$0xf]
      %v1276 = vld [vmem:[%s1269 + $0x24] sm:$0xf]
      %v1277 = vld [vmem:[%s1269 + $0x28] sm:$0xf]
      %v1278 = vld [vmem:[%s1269 + $0x30] sm:$0xf]
      %v1279 = vld [vmem:[%s1269 + $0x34] sm:$0xf]
      %v1280 = vld [vmem:[%s1269 + $0x3c] sm:$0xf]
      %v1281 = vld [vmem:[%s1269 + $0x40] sm:$0xf]
      %v1282 = vld [vmem:[%s1269 + $0x48] sm:$0xf]
      %v1283 = vld [vmem:[%s1269 + $0x4c] sm:$0xf]
      %v1284 = vld [vmem:[%s1269 + $0x54] sm:$0xf]
      %v1285 = vld [vmem:[%s1269 + $0x58] sm:$0xf]
      %1302 = vrot.lane.b32.xlu0 %v1270, 24
      %v1303 = vpop.permute.xlu0 %1302
      %1304 = vrot.lane.b32.xlu0 %v1271, 24
      %v1305 = vpop.permute.xlu0 %1304
      %1306 = vrot.lane.b32.xlu0 %v1272, 24
      %v1307 = vpop.permute.xlu0 %1306
      %1308 = vrot.lane.b32.xlu0 %v1273, 24
      %v1309 = vpop.permute.xlu0 %1308
      %1310 = vrot.lane.b32.xlu0 %v1274, 24
      %v1311 = vpop.permute.xlu0 %1310
      %1312 = vrot.lane.b32.xlu0 %v1275, 24
      %v1313 = vpop.permute.xlu0 %1312
      %1314 = vrot.lane.b32.xlu0 %v1276, 24
      %v1315 = vpop.permute.xlu0 %1314
      %1316 = vrot.lane.b32.xlu0 %v1277, 24
      %v1317 = vpop.permute.xlu0 %1316
      %1318 = vrot.lane.b32.xlu0 %v1278, 24
      %v1319 = vpop.permute.xlu0 %1318
      %1320 = vrot.lane.b32.xlu0 %v1279, 24
      %v1321 = vpop.permute.xlu0 %1320
      %1322 = vrot.lane.b32.xlu0 %v1280, 24
      %v1323 = vpop.permute.xlu0 %1322
      %1324 = vrot.lane.b32.xlu0 %v1281, 24
      %v1325 = vpop.permute.xlu0 %1324
      %1326 = vrot.lane.b32.xlu0 %v1282, 24
      %v1327 = vpop.permute.xlu0 %1326
      %1328 = vrot.lane.b32.xlu0 %v1283, 24
      %v1329 = vpop.permute.xlu0 %1328
      %1330 = vrot.lane.b32.xlu0 %v1284, 24
      %v1331 = vpop.permute.xlu0 %1330
      %1332 = vrot.lane.b32.xlu0 %v1285, 24
      %v1333 = vpop.permute.xlu0 %1332
      %vm1350 = vcmask 224448
      %1351 = vst.msk [vmem:[#allocation2] sm:$0xf] %vm1350, %v1303
      %1352 = vst.msk [vmem:[#allocation2 + $0x4] sm:$0xf] %vm1350, %v1305
      %1353 = vst.msk [vmem:[#allocation2 + $0x8] sm:$0xf] %vm1350, %v1307
      %1354 = vst.msk [vmem:[#allocation2 + $0xc] sm:$0xf] %vm1350, %v1309
      %1355 = vst.msk [vmem:[#allocation2 + $0x10] sm:$0xf] %vm1350, %v1311
      %1356 = vst.msk [vmem:[#allocation2 + $0x14] sm:$0xf] %vm1350, %v1313
      %1357 = vst.msk [vmem:[#allocation2 + $0x18] sm:$0xf] %vm1350, %v1315
      %1358 = vst.msk [vmem:[#allocation2 + $0x1c] sm:$0xf] %vm1350, %v1317
      %1359 = vst.msk [vmem:[#allocation2 + $0x20] sm:$0xf] %vm1350, %v1319
      %1360 = vst.msk [vmem:[#allocation2 + $0x24] sm:$0xf] %vm1350, %v1321
      %1361 = vst.msk [vmem:[#allocation2 + $0x28] sm:$0xf] %vm1350, %v1323
      %1362 = vst.msk [vmem:[#allocation2 + $0x2c] sm:$0xf] %vm1350, %v1325
      %1363 = vst.msk [vmem:[#allocation2 + $0x30] sm:$0xf] %vm1350, %v1327
      %1364 = vst.msk [vmem:[#allocation2 + $0x34] sm:$0xf] %vm1350, %v1329
      %1365 = vst.msk [vmem:[#allocation2 + $0x38] sm:$0xf] %vm1350, %v1331
      %1366 = vst.msk [vmem:[#allocation2 + $0x3c] sm:$0xf] %vm1350, %v1333
      %v1367 = vld [vmem:[%s1269] sm:$0xf]
      %v1368 = vld [vmem:[%s1269 + $0x4] sm:$0xf]
      %v1369 = vld [vmem:[%s1269 + $0x8] sm:$0x1]
      %v1370 = vld [vmem:[%s1269 + $0xc] sm:$0xf]
      %v1371 = vld [vmem:[%s1269 + $0x10] sm:$0xf]
      %v1372 = vld [vmem:[%s1269 + $0x14] sm:$0x1]
      %v1373 = vld [vmem:[%s1269 + $0x18] sm:$0xf]
      %v1374 = vld [vmem:[%s1269 + $0x1c] sm:$0xf]
      %v1375 = vld [vmem:[%s1269 + $0x20] sm:$0x1]
      %v1376 = vld [vmem:[%s1269 + $0x24] sm:$0xf]
      %v1377 = vld [vmem:[%s1269 + $0x28] sm:$0xf]
      %v1378 = vld [vmem:[%s1269 + $0x2c] sm:$0x1]
      %v1379 = vld [vmem:[%s1269 + $0x30] sm:$0xf]
      %v1380 = vld [vmem:[%s1269 + $0x34] sm:$0xf]
      %v1381 = vld [vmem:[%s1269 + $0x38] sm:$0x1]
      %v1382 = vld [vmem:[%s1269 + $0x3c] sm:$0xf]
      %v1383 = vld [vmem:[%s1269 + $0x40] sm:$0xf]
      %v1384 = vld [vmem:[%s1269 + $0x44] sm:$0x1]
      %v1385 = vld [vmem:[%s1269 + $0x48] sm:$0xf]
      %v1386 = vld [vmem:[%s1269 + $0x4c] sm:$0xf]
      %v1387 = vld [vmem:[%s1269 + $0x50] sm:$0x1]
      %v1388 = vld [vmem:[%s1269 + $0x54] sm:$0xf]
      %v1389 = vld [vmem:[%s1269 + $0x58] sm:$0xf]
      %v1390 = vld [vmem:[%s1269 + $0x5c] sm:$0x1]
      %v1392 = vshrl.u32 %v1367, 16
      %v1394 = vrot.slane %v1392, 4
      %v1395 = vshll.u32 %v1367, 16
      %v1397 = vrot.slane %v1395, 5
      %v1398 = vor.u32 %v1394, %v1397
      %v1399 = vrot.slane %v1398, 4
      %v1401 = vshll.u32 %v1368, 16
      %v1403 = vrot.slane %v1401, 5
      %v1404 = vsel %vm285, %v1399, %v1403
      %v1405 = vshrl.u32 %v1368, 16
      %v1407 = vrot.slane %v1405, 4
      %v1408 = vor.u32 %v1407, %v1403
      %v1409 = vrot.slane %v1408, 4
      %v1411 = vshll.u32 %v1369, 16
      %v1413 = vrot.slane %v1411, 5
      %v1414 = vsel %vm285, %v1409, %v1413
      %v1416 = vshrl.u32 %v1370, 16
      %v1418 = vrot.slane %v1416, 4
      %v1419 = vshll.u32 %v1370, 16
      %v1421 = vrot.slane %v1419, 5
      %v1422 = vor.u32 %v1418, %v1421
      %v1423 = vrot.slane %v1422, 4
      %v1425 = vshll.u32 %v1371, 16
      %v1427 = vrot.slane %v1425, 5
      %v1428 = vsel %vm285, %v1423, %v1427
      %v1429 = vshrl.u32 %v1371, 16
      %v1431 = vrot.slane %v1429, 4
      %v1432 = vor.u32 %v1431, %v1427
      %v1433 = vrot.slane %v1432, 4
      %v1435 = vshll.u32 %v1372, 16
      %v1437 = vrot.slane %v1435, 5
      %v1438 = vsel %vm285, %v1433, %v1437
      %v1440 = vshrl.u32 %v1373, 16
      %v1442 = vrot.slane %v1440, 4
      %v1443 = vshll.u32 %v1373, 16
      %v1445 = vrot.slane %v1443, 5
      %v1446 = vor.u32 %v1442, %v1445
      %v1447 = vrot.slane %v1446, 4
      %v1449 = vshll.u32 %v1374, 16
      %v1451 = vrot.slane %v1449, 5
      %v1452 = vsel %vm285, %v1447, %v1451
      %v1453 = vshrl.u32 %v1374, 16
      %v1455 = vrot.slane %v1453, 4
      %v1456 = vor.u32 %v1455, %v1451
      %v1457 = vrot.slane %v1456, 4
      %v1459 = vshll.u32 %v1375, 16
      %v1461 = vrot.slane %v1459, 5
      %v1462 = vsel %vm285, %v1457, %v1461
      %v1464 = vshrl.u32 %v1376, 16
      %v1466 = vrot.slane %v1464, 4
      %v1467 = vshll.u32 %v1376, 16
      %v1469 = vrot.slane %v1467, 5
      %v1470 = vor.u32 %v1466, %v1469
      %v1471 = vrot.slane %v1470, 4
      %v1473 = vshll.u32 %v1377, 16
      %v1475 = vrot.slane %v1473, 5
      %v1476 = vsel %vm285, %v1471, %v1475
      %v1477 = vshrl.u32 %v1377, 16
      %v1479 = vrot.slane %v1477, 4
      %v1480 = vor.u32 %v1479, %v1475
      %v1481 = vrot.slane %v1480, 4
      %v1483 = vshll.u32 %v1378, 16
      %v1485 = vrot.slane %v1483, 5
      %v1486 = vsel %vm285, %v1481, %v1485
      %v1488 = vshrl.u32 %v1379, 16
      %v1490 = vrot.slane %v1488, 4
      %v1491 = vshll.u32 %v1379, 16
      %v1493 = vrot.slane %v1491, 5
      %v1494 = vor.u32 %v1490, %v1493
      %v1495 = vrot.slane %v1494, 4
      %v1497 = vshll.u32 %v1380, 16
      %v1499 = vrot.slane %v1497, 5
      %v1500 = vsel %vm285, %v1495, %v1499
      %v1501 = vshrl.u32 %v1380, 16
      %v1503 = vrot.slane %v1501, 4
      %v1504 = vor.u32 %v1503, %v1499
      %v1505 = vrot.slane %v1504, 4
      %v1507 = vshll.u32 %v1381, 16
      %v1509 = vrot.slane %v1507, 5
      %v1510 = vsel %vm285, %v1505, %v1509
      %v1512 = vshrl.u32 %v1382, 16
      %v1514 = vrot.slane %v1512, 4
      %v1515 = vshll.u32 %v1382, 16
      %v1517 = vrot.slane %v1515, 5
      %v1518 = vor.u32 %v1514, %v1517
      %v1519 = vrot.slane %v1518, 4
      %v1521 = vshll.u32 %v1383, 16
      %v1523 = vrot.slane %v1521, 5
      %v1524 = vsel %vm285, %v1519, %v1523
      %v1525 = vshrl.u32 %v1383, 16
      %v1527 = vrot.slane %v1525, 4
      %v1528 = vor.u32 %v1527, %v1523
      %v1529 = vrot.slane %v1528, 4
      %v1531 = vshll.u32 %v1384, 16
      %v1533 = vrot.slane %v1531, 5
      %v1534 = vsel %vm285, %v1529, %v1533
      %v1536 = vshrl.u32 %v1385, 16
      %v1538 = vrot.slane %v1536, 4
      %v1539 = vshll.u32 %v1385, 16
      %v1541 = vrot.slane %v1539, 5
      %v1542 = vor.u32 %v1538, %v1541
      %v1543 = vrot.slane %v1542, 4
      %v1545 = vshll.u32 %v1386, 16
      %v1547 = vrot.slane %v1545, 5
      %v1548 = vsel %vm285, %v1543, %v1547
      %v1549 = vshrl.u32 %v1386, 16
      %v1551 = vrot.slane %v1549, 4
      %v1552 = vor.u32 %v1551, %v1547
      %v1553 = vrot.slane %v1552, 4
      %v1555 = vshll.u32 %v1387, 16
      %v1557 = vrot.slane %v1555, 5
      %v1558 = vsel %vm285, %v1553, %v1557
      %v1560 = vshrl.u32 %v1388, 16
      %v1562 = vrot.slane %v1560, 4
      %v1563 = vshll.u32 %v1388, 16
      %v1565 = vrot.slane %v1563, 5
      %v1566 = vor.u32 %v1562, %v1565
      %v1567 = vrot.slane %v1566, 4
      %v1569 = vshll.u32 %v1389, 16
      %v1571 = vrot.slane %v1569, 5
      %v1572 = vsel %vm285, %v1567, %v1571
      %v1573 = vshrl.u32 %v1389, 16
      %v1575 = vrot.slane %v1573, 4
      %v1576 = vor.u32 %v1575, %v1571
      %v1577 = vrot.slane %v1576, 4
      %v1579 = vshll.u32 %v1390, 16
      %v1581 = vrot.slane %v1579, 5
      %v1582 = vsel %vm285, %v1577, %v1581
      %1583 = vrot.lane.b32.xlu0 %v1404, 28
      %v1584 = vpop.permute.xlu0 %1583
      %1585 = vrot.lane.b32.xlu0 %v1414, 28
      %v1586 = vpop.permute.xlu0 %1585
      %1587 = vrot.lane.b32.xlu0 %v1428, 28
      %v1588 = vpop.permute.xlu0 %1587
      %1589 = vrot.lane.b32.xlu0 %v1438, 28
      %v1590 = vpop.permute.xlu0 %1589
      %1591 = vrot.lane.b32.xlu0 %v1452, 28
      %v1592 = vpop.permute.xlu0 %1591
      %1593 = vrot.lane.b32.xlu0 %v1462, 28
      %v1594 = vpop.permute.xlu0 %1593
      %1595 = vrot.lane.b32.xlu0 %v1476, 28
      %v1596 = vpop.permute.xlu0 %1595
      %1597 = vrot.lane.b32.xlu0 %v1486, 28
      %v1598 = vpop.permute.xlu0 %1597
      %1599 = vrot.lane.b32.xlu0 %v1500, 28
      %v1600 = vpop.permute.xlu0 %1599
      %1601 = vrot.lane.b32.xlu0 %v1510, 28
      %v1602 = vpop.permute.xlu0 %1601
      %1603 = vrot.lane.b32.xlu0 %v1524, 28
      %v1604 = vpop.permute.xlu0 %1603
      %1605 = vrot.lane.b32.xlu0 %v1534, 28
      %v1606 = vpop.permute.xlu0 %1605
      %1607 = vrot.lane.b32.xlu0 %v1548, 28
      %v1608 = vpop.permute.xlu0 %1607
      %1609 = vrot.lane.b32.xlu0 %v1558, 28
      %v1610 = vpop.permute.xlu0 %1609
      %1611 = vrot.lane.b32.xlu0 %v1572, 28
      %v1612 = vpop.permute.xlu0 %1611
      %1613 = vrot.lane.b32.xlu0 %v1582, 28
      %v1614 = vpop.permute.xlu0 %1613
      %vm1631 = vcmask 257248
      %1632 = vst.msk [vmem:[#allocation2] sm:$0xf] %vm1631, %v1584
      %1633 = vst.msk [vmem:[#allocation2 + $0x4] sm:$0xf] %vm1631, %v1586
      %1634 = vst.msk [vmem:[#allocation2 + $0x8] sm:$0xf] %vm1631, %v1588
      %1635 = vst.msk [vmem:[#allocation2 + $0xc] sm:$0xf] %vm1631, %v1590
      %1636 = vst.msk [vmem:[#allocation2 + $0x10] sm:$0xf] %vm1631, %v1592
      %1637 = vst.msk [vmem:[#allocation2 + $0x14] sm:$0xf] %vm1631, %v1594
      %1638 = vst.msk [vmem:[#allocation2 + $0x18] sm:$0xf] %vm1631, %v1596
      %1639 = vst.msk [vmem:[#allocation2 + $0x1c] sm:$0xf] %vm1631, %v1598
      %1640 = vst.msk [vmem:[#allocation2 + $0x20] sm:$0xf] %vm1631, %v1600
      %1641 = vst.msk [vmem:[#allocation2 + $0x24] sm:$0xf] %vm1631, %v1602
      %1642 = vst.msk [vmem:[#allocation2 + $0x28] sm:$0xf] %vm1631, %v1604
      %1643 = vst.msk [vmem:[#allocation2 + $0x2c] sm:$0xf] %vm1631, %v1606
      %1644 = vst.msk [vmem:[#allocation2 + $0x30] sm:$0xf] %vm1631, %v1608
      %1645 = vst.msk [vmem:[#allocation2 + $0x34] sm:$0xf] %vm1631, %v1610
      %1646 = vst.msk [vmem:[#allocation2 + $0x38] sm:$0xf] %vm1631, %v1612
      %1647 = vst.msk [vmem:[#allocation2 + $0x3c] sm:$0xf] %vm1631, %v1614
      %v1648 = vld [vmem:[%s1269] sm:$0xe]
      %v1649 = vld [vmem:[%s1269 + $0x4] sm:$0xf]
      %v1650 = vld [vmem:[%s1269 + $0x8] sm:$0x1]
      %v1651 = vld [vmem:[%s1269 + $0xc] sm:$0xe]
      %v1652 = vld [vmem:[%s1269 + $0x10] sm:$0xf]
      %v1653 = vld [vmem:[%s1269 + $0x14] sm:$0x1]
      %v1654 = vld [vmem:[%s1269 + $0x18] sm:$0xe]
      %v1655 = vld [vmem:[%s1269 + $0x1c] sm:$0xf]
      %v1656 = vld [vmem:[%s1269 + $0x20] sm:$0x1]
      %v1657 = vld [vmem:[%s1269 + $0x24] sm:$0xe]
      %v1658 = vld [vmem:[%s1269 + $0x28] sm:$0xf]
      %v1659 = vld [vmem:[%s1269 + $0x2c] sm:$0x1]
      %v1660 = vld [vmem:[%s1269 + $0x30] sm:$0xe]
      %v1661 = vld [vmem:[%s1269 + $0x34] sm:$0xf]
      %v1662 = vld [vmem:[%s1269 + $0x38] sm:$0x1]
      %v1663 = vld [vmem:[%s1269 + $0x3c] sm:$0xe]
      %v1664 = vld [vmem:[%s1269 + $0x40] sm:$0xf]
      %v1665 = vld [vmem:[%s1269 + $0x44] sm:$0x1]
      %v1666 = vld [vmem:[%s1269 + $0x48] sm:$0xe]
      %v1667 = vld [vmem:[%s1269 + $0x4c] sm:$0xf]
      %v1668 = vld [vmem:[%s1269 + $0x50] sm:$0x1]
      %v1669 = vld [vmem:[%s1269 + $0x54] sm:$0xe]
      %v1670 = vld [vmem:[%s1269 + $0x58] sm:$0xf]
      %v1671 = vld [vmem:[%s1269 + $0x5c] sm:$0x1]
      %v1696 = vrot.slane %v1648, 5
      %v1697 = vrot.slane %v1696, 4
      %v1698 = vrot.slane %v1649, 5
      %v1699 = vsel %vm593, %v1697, %v1698
      %v1700 = vrot.slane %v1698, 4
      %v1701 = vrot.slane %v1650, 5
      %v1702 = vsel %vm593, %v1700, %v1701
      %v1703 = vrot.slane %v1651, 5
      %v1704 = vrot.slane %v1703, 4
      %v1705 = vrot.slane %v1652, 5
      %v1706 = vsel %vm593, %v1704, %v1705
      %v1707 = vrot.slane %v1705, 4
      %v1708 = vrot.slane %v1653, 5
      %v1709 = vsel %vm593, %v1707, %v1708
      %v1710 = vrot.slane %v1654, 5
      %v1711 = vrot.slane %v1710, 4
      %v1712 = vrot.slane %v1655, 5
      %v1713 = vsel %vm593, %v1711, %v1712
      %v1714 = vrot.slane %v1712, 4
      %v1715 = vrot.slane %v1656, 5
      %v1716 = vsel %vm593, %v1714, %v1715
      %v1717 = vrot.slane %v1657, 5
      %v1718 = vrot.slane %v1717, 4
      %v1719 = vrot.slane %v1658, 5
      %v1720 = vsel %vm593, %v1718, %v1719
      %v1721 = vrot.slane %v1719, 4
      %v1722 = vrot.slane %v1659, 5
      %v1723 = vsel %vm593, %v1721, %v1722
      %v1724 = vrot.slane %v1660, 5
      %v1725 = vrot.slane %v1724, 4
      %v1726 = vrot.slane %v1661, 5
      %v1727 = vsel %vm593, %v1725, %v1726
      %v1728 = vrot.slane %v1726, 4
      %v1729 = vrot.slane %v1662, 5
      %v1730 = vsel %vm593, %v1728, %v1729
      %v1731 = vrot.slane %v1663, 5
      %v1732 = vrot.slane %v1731, 4
      %v1733 = vrot.slane %v1664, 5
      %v1734 = vsel %vm593, %v1732, %v1733
      %v1735 = vrot.slane %v1733, 4
      %v1736 = vrot.slane %v1665, 5
      %v1737 = vsel %vm593, %v1735, %v1736
      %v1738 = vrot.slane %v1666, 5
      %v1739 = vrot.slane %v1738, 4
      %v1740 = vrot.slane %v1667, 5
      %v1741 = vsel %vm593, %v1739, %v1740
      %v1742 = vrot.slane %v1740, 4
      %v1743 = vrot.slane %v1668, 5
      %v1744 = vsel %vm593, %v1742, %v1743
      %v1745 = vrot.slane %v1669, 5
      %v1746 = vrot.slane %v1745, 4
      %v1747 = vrot.slane %v1670, 5
      %v1748 = vsel %vm593, %v1746, %v1747
      %v1749 = vrot.slane %v1747, 4
      %v1750 = vrot.slane %v1671, 5
      %v1751 = vsel %vm593, %v1749, %v1750
      %1752 = vrot.lane.b32.xlu0 %v1699, 32
      %v1753 = vpop.permute.xlu0 %1752
      %1754 = vrot.lane.b32.xlu0 %v1702, 32
      %v1755 = vpop.permute.xlu0 %1754
      %1756 = vrot.lane.b32.xlu0 %v1706, 32
      %v1757 = vpop.permute.xlu0 %1756
      %1758 = vrot.lane.b32.xlu0 %v1709, 32
      %v1759 = vpop.permute.xlu0 %1758
      %1760 = vrot.lane.b32.xlu0 %v1713, 32
      %v1761 = vpop.permute.xlu0 %1760
      %1762 = vrot.lane.b32.xlu0 %v1716, 32
      %v1763 = vpop.permute.xlu0 %1762
      %1764 = vrot.lane.b32.xlu0 %v1720, 32
      %v1765 = vpop.permute.xlu0 %1764
      %1766 = vrot.lane.b32.xlu0 %v1723, 32
      %v1767 = vpop.permute.xlu0 %1766
      %1768 = vrot.lane.b32.xlu0 %v1727, 32
      %v1769 = vpop.permute.xlu0 %1768
      %1770 = vrot.lane.b32.xlu0 %v1730, 32
      %v1771 = vpop.permute.xlu0 %1770
      %1772 = vrot.lane.b32.xlu0 %v1734, 32
      %v1773 = vpop.permute.xlu0 %1772
      %1774 = vrot.lane.b32.xlu0 %v1737, 32
      %v1775 = vpop.permute.xlu0 %1774
      %1776 = vrot.lane.b32.xlu0 %v1741, 32
      %v1777 = vpop.permute.xlu0 %1776
      %1778 = vrot.lane.b32.xlu0 %v1744, 32
      %v1779 = vpop.permute.xlu0 %1778
      %1780 = vrot.lane.b32.xlu0 %v1748, 32
      %v1781 = vpop.permute.xlu0 %1780
      %1782 = vrot.lane.b32.xlu0 %v1751, 32
      %v1783 = vpop.permute.xlu0 %1782
      %vm1800 = vcmask 290048
      %1801 = vst.msk [vmem:[#allocation2] sm:$0xf] %vm1800, %v1753
      %1802 = vst.msk [vmem:[#allocation2 + $0x4] sm:$0xf] %vm1800, %v1755
      %1803 = vst.msk [vmem:[#allocation2 + $0x8] sm:$0xf] %vm1800, %v1757
      %1804 = vst.msk [vmem:[#allocation2 + $0xc] sm:$0xf] %vm1800, %v1759
      %1805 = vst.msk [vmem:[#allocation2 + $0x10] sm:$0xf] %vm1800, %v1761
      %1806 = vst.msk [vmem:[#allocation2 + $0x14] sm:$0xf] %vm1800, %v1763
      %1807 = vst.msk [vmem:[#allocation2 + $0x18] sm:$0xf] %vm1800, %v1765
      %1808 = vst.msk [vmem:[#allocation2 + $0x1c] sm:$0xf] %vm1800, %v1767
      %1809 = vst.msk [vmem:[#allocation2 + $0x20] sm:$0xf] %vm1800, %v1769
      %1810 = vst.msk [vmem:[#allocation2 + $0x24] sm:$0xf] %vm1800, %v1771
      %1811 = vst.msk [vmem:[#allocation2 + $0x28] sm:$0xf] %vm1800, %v1773
      %1812 = vst.msk [vmem:[#allocation2 + $0x2c] sm:$0xf] %vm1800, %v1775
      %1813 = vst.msk [vmem:[#allocation2 + $0x30] sm:$0xf] %vm1800, %v1777
      %1814 = vst.msk [vmem:[#allocation2 + $0x34] sm:$0xf] %vm1800, %v1779
      %1815 = vst.msk [vmem:[#allocation2 + $0x38] sm:$0xf] %vm1800, %v1781
      %1816 = vst.msk [vmem:[#allocation2 + $0x3c] sm:$0xf] %vm1800, %v1783
      %v1817 = vld [vmem:[#allocation2] sm:$0xf]
      %v1818 = vld [vmem:[#allocation2 + $0x4] sm:$0xf]
      %v1819 = vld [vmem:[#allocation2 + $0x8] sm:$0xf]
      %v1820 = vld [vmem:[#allocation2 + $0xc] sm:$0xf]
      %v1821 = vld [vmem:[#allocation2 + $0x10] sm:$0xf]
      %v1822 = vld [vmem:[#allocation2 + $0x14] sm:$0xf]
      %v1823 = vld [vmem:[#allocation2 + $0x18] sm:$0xf]
      %v1824 = vld [vmem:[#allocation2 + $0x1c] sm:$0xf]
      %v1825 = vld [vmem:[#allocation2 + $0x20] sm:$0xf]
      %v1826 = vld [vmem:[#allocation2 + $0x24] sm:$0xf]
      %v1827 = vld [vmem:[#allocation2 + $0x28] sm:$0xf]
      %v1828 = vld [vmem:[#allocation2 + $0x2c] sm:$0xf]
      %v1829 = vld [vmem:[#allocation2 + $0x30] sm:$0xf]
      %v1830 = vld [vmem:[#allocation2 + $0x34] sm:$0xf]
      %v1831 = vld [vmem:[#allocation2 + $0x38] sm:$0xf]
      %v1832 = vld [vmem:[#allocation2 + $0x3c] sm:$0xf]
      %v1833 = vld [vmem:[%s1] sm:$0xf]
      %v1834 = vld [vmem:[%s1 + $0x4] sm:$0xf]
      %v1835 = vld [vmem:[%s1 + $0x8] sm:$0xf]
      %v1836 = vld [vmem:[%s1 + $0xc] sm:$0xf]
      %v1837 = vld [vmem:[%s1 + $0x10] sm:$0x3]
      %v1854 = vunpack.c.l.b16 %v1817
      %v1855 = vunpack.c.l.b16 %v1818
      %v1856 = vunpack.c.l.b16 %v1819
      %v1857 = vunpack.c.l.b16 %v1820
      %v1858 = vunpack.c.l.b16 %v1821
      %v1859 = vunpack.c.l.b16 %v1822
      %v1860 = vunpack.c.l.b16 %v1823
      %v1861 = vunpack.c.l.b16 %v1824
      %v1862 = vunpack.c.l.b16 %v1825
      %v1863 = vunpack.c.l.b16 %v1826
      %v1864 = vunpack.c.l.b16 %v1827
      %v1865 = vunpack.c.l.b16 %v1828
      %v1866 = vunpack.c.l.b16 %v1829
      %v1867 = vunpack.c.l.b16 %v1830
      %v1868 = vunpack.c.l.b16 %v1831
      %v1869 = vunpack.c.l.b16 %v1832
      %v1870 = vpack.c.b16 %v1855, %v1854
      %v1871 = vpack.c.b16 %v1857, %v1856
      %v1872 = vpack.c.b16 %v1859, %v1858
      %v1873 = vpack.c.b16 %v1861, %v1860
      %v1874 = vpack.c.b16 %v1863, %v1862
      %v1875 = vpack.c.b16 %v1865, %v1864
      %v1876 = vpack.c.b16 %v1867, %v1866
      %v1877 = vpack.c.b16 %v1869, %v1868
      %v1883 = vunpack.c.l.b16 %v1833
      %v1884 = vunpack.c.l.b16 %v1834
      %v1885 = vunpack.c.l.b16 %v1835
      %v1886 = vunpack.c.l.b16 %v1836
      %v1887 = vunpack.c.l.b16 %v1837
      %v1888 = vpack.c.b16 %v1884, %v1883
      %v1889 = vpack.c.b16 %v1886, %v1885
      %v1890 = vpack.c.b16 %v1887, %v1887
      %vm1893 = vcmask 293888
      %v1895 = vsel %vm1893, %v1870, 0
      %v1898 = vsel %vm1893, %v1871, 0
      %v1901 = vsel %vm1893, %v1872, 0
      %v1904 = vsel %vm1893, %v1873, 0
      %v1907 = vsel %vm1893, %v1874, 0
      %v1910 = vsel %vm1893, %v1875, 0
      %v1913 = vsel %vm1893, %v1876, 0
      %v1916 = vsel %vm1893, %v1877, 0
      %vm1918 = vcmask 1041408
      %v1920 = vsel %vm1918, %v1890, 0
      %1922 = vmatprep.subr.bf16.mxu0 0
      %1923 = vmatpush1.bf16.msra.mxu0 0
      %1924 = vmatprep.subr.bf16.mxu0 0
      %1925 = vmatpush1.bf16.msra.mxu0 0
      %1926 = vmatprep.subr.bf16.mxu0 0
      %1927 = vmatpush1.bf16.msra.mxu0 0
      %1928 = vmatprep.subr.bf16.mxu0 0
      %1929 = vmatpush1.bf16.msra.mxu0 0
      %1930 = vmatprep.subr.bf16.mxu0 0
      %1931 = vmatpush1.bf16.msra.mxu0 0
      %1932 = vmatprep.subr.bf16.mxu0 0
      %1933 = vmatpush1.bf16.msra.mxu0 %v1920
      %1934 = vmatprep.subr.bf16.mxu0 0
      %1935 = vmatpush1.bf16.msra.mxu0 %v1889
      %1936 = vmatprep.subr.bf16.mxu0 0
      %1937 = vmatpush1.bf16.msra.mxu0 %v1888
      %1938 = vmatprep.subr.bf16.mxu0 0
      %1939 = vmatpush2.bf16.msra.mxu0 0
      %1940 = vmatprep.subr.bf16.mxu0 0
      %1941 = vmatpush2.bf16.msra.mxu0 0
      %1942 = vmatprep.subr.bf16.mxu0 0
      %1943 = vmatpush2.bf16.msra.mxu0 0
      %1944 = vmatprep.subr.bf16.mxu0 0
      %1945 = vmatpush2.bf16.msra.mxu0 0
      %1946 = vmatprep.subr.bf16.mxu0 0
      %1947 = vmatpush2.bf16.msra.mxu0 0
      %1948 = vmatprep.subr.bf16.mxu0 0
      %1949 = vmatpush2.bf16.msra.mxu0 0
      %1950 = vmatprep.subr.bf16.mxu0 0
      %1951 = vmatpush2.bf16.msra.mxu0 0
      %1952 = vmatprep.subr.bf16.mxu0 0
      %1953 = vmatpush2.bf16.msra.mxu0 0
      %1954 = vmatprep.mubr.bf16.mxu0 0
      %1955 = vmatmul.mubr.bf16.gmra.mxu0 %v1895
      %v1956 = vpop.f32.mrf.mxu0
      %v1957 = vadd.f32 0.0, %v1956
      %v1958 = vpop.f32.mrf.mxu0
      %v1959 = vpop.f32.mrf.mxu0
      %v1960 = vadd.f32 0.0, %v1959
      %v1961 = vpop.f32.mrf.mxu0
      %1962 = vmatprep.mubr.bf16.mxu0 0
      %1963 = vmatmul.mubr.bf16.gmra.mxu0 %v1898
      %v1964 = vpop.f32.mrf.mxu0
      %v1965 = vadd.f32 0.0, %v1964
      %v1966 = vpop.f32.mrf.mxu0
      %v1967 = vpop.f32.mrf.mxu0
      %v1968 = vadd.f32 0.0, %v1967
      %v1969 = vpop.f32.mrf.mxu0
      %1970 = vmatprep.mubr.bf16.mxu0 0
      %1971 = vmatmul.mubr.bf16.gmra.mxu0 %v1901
      %v1972 = vpop.f32.mrf.mxu0
      %v1973 = vadd.f32 0.0, %v1972
      %v1974 = vpop.f32.mrf.mxu0
      %v1975 = vpop.f32.mrf.mxu0
      %v1976 = vadd.f32 0.0, %v1975
      %v1977 = vpop.f32.mrf.mxu0
      %1978 = vmatprep.mubr.bf16.mxu0 0
      %1979 = vmatmul.mubr.bf16.gmra.mxu0 %v1904
      %v1980 = vpop.f32.mrf.mxu0
      %v1981 = vadd.f32 0.0, %v1980
      %v1982 = vpop.f32.mrf.mxu0
      %v1983 = vpop.f32.mrf.mxu0
      %v1984 = vadd.f32 0.0, %v1983
      %v1985 = vpop.f32.mrf.mxu0
      %1986 = vmatprep.mubr.bf16.mxu0 0
      %1987 = vmatmul.mubr.bf16.gmra.mxu0 %v1907
      %v1988 = vpop.f32.mrf.mxu0
      %v1989 = vadd.f32 0.0, %v1988
      %v1990 = vpop.f32.mrf.mxu0
      %v1991 = vpop.f32.mrf.mxu0
      %v1992 = vadd.f32 0.0, %v1991
      %v1993 = vpop.f32.mrf.mxu0
      %1994 = vmatprep.mubr.bf16.mxu0 0
      %1995 = vmatmul.mubr.bf16.gmra.mxu0 %v1910
      %v1996 = vpop.f32.mrf.mxu0
      %v1997 = vadd.f32 0.0, %v1996
      %v1998 = vpop.f32.mrf.mxu0
      %v1999 = vpop.f32.mrf.mxu0
      %v2000 = vadd.f32 0.0, %v1999
      %v2001 = vpop.f32.mrf.mxu0
      %2002 = vmatprep.mubr.bf16.mxu0 0
      %2003 = vmatmul.mubr.bf16.gmra.mxu0 %v1913
      %v2004 = vpop.f32.mrf.mxu0
      %v2005 = vadd.f32 0.0, %v2004
      %v2006 = vpop.f32.mrf.mxu0
      %v2007 = vpop.f32.mrf.mxu0
      %v2008 = vadd.f32 0.0, %v2007
      %v2009 = vpop.f32.mrf.mxu0
      %2010 = vmatprep.mubr.bf16.mxu0 0
      %2011 = vmatmul.mubr.bf16.gmra.mxu0 %v1916
      %v2012 = vpop.f32.mrf.mxu0
      %v2013 = vadd.f32 0.0, %v2012
      %v2014 = vpop.f32.mrf.mxu0
      %v2015 = vpop.f32.mrf.mxu0
      %v2016 = vadd.f32 0.0, %v2015
      %v2017 = vpop.f32.mrf.mxu0
      %2018 = vdwg.mxu0
      %v2019 = vld [vmem:[%s2] sm:$0x1]
      %v2021 = vlaneseq
      %v2022 = vshrl.u32 %v2021, 7
      %v2023 = vsub.s32 0, %v2022
      %v2024 = vrot.slane %v2019, %v2023
      %v2026 = vmul.f32 %v1957, %v2024
      %v2027 = vmul.f32 %v1960, %v2024
      %v2028 = vmul.f32 %v1965, %v2024
      %v2029 = vmul.f32 %v1968, %v2024
      %v2030 = vmul.f32 %v1973, %v2024
      %v2031 = vmul.f32 %v1976, %v2024
      %v2032 = vmul.f32 %v1981, %v2024
      %v2033 = vmul.f32 %v1984, %v2024
      %v2034 = vmul.f32 %v1989, %v2024
      %v2035 = vmul.f32 %v1992, %v2024
      %v2036 = vmul.f32 %v1997, %v2024
      %v2037 = vmul.f32 %v2000, %v2024
      %v2038 = vmul.f32 %v2005, %v2024
      %v2039 = vmul.f32 %v2008, %v2024
      %v2040 = vmul.f32 %v2013, %v2024
      %v2041 = vmul.f32 %v2016, %v2024
      %v2042 = vld [vmem:[%s3] sm:$0x1]
      %v2044 = vlaneseq
      %v2045 = vshrl.u32 %v2044, 7
      %v2046 = vsub.s32 0, %v2045
      %v2047 = vrot.slane %v2042, %v2046
      %v2049 = vadd.f32 %v2026, %v2047
      %v2050 = vadd.f32 %v2027, %v2047
      %v2051 = vadd.f32 %v2028, %v2047
      %v2052 = vadd.f32 %v2029, %v2047
      %v2053 = vadd.f32 %v2030, %v2047
      %v2054 = vadd.f32 %v2031, %v2047
      %v2055 = vadd.f32 %v2032, %v2047
      %v2056 = vadd.f32 %v2033, %v2047
      %v2057 = vadd.f32 %v2034, %v2047
      %v2058 = vadd.f32 %v2035, %v2047
      %v2059 = vadd.f32 %v2036, %v2047
      %v2060 = vadd.f32 %v2037, %v2047
      %v2061 = vadd.f32 %v2038, %v2047
      %v2062 = vadd.f32 %v2039, %v2047
      %v2063 = vadd.f32 %v2040, %v2047
      %v2064 = vadd.f32 %v2041, %v2047
      %vm2065 = vcmp.gt.f32.partialorder %v2049, 0.0
      %vm2066 = vcmp.gt.f32.partialorder %v2050, 0.0
      %vm2067 = vcmp.gt.f32.partialorder %v2051, 0.0
      %vm2068 = vcmp.gt.f32.partialorder %v2052, 0.0
      %vm2069 = vcmp.gt.f32.partialorder %v2053, 0.0
      %vm2070 = vcmp.gt.f32.partialorder %v2054, 0.0
      %vm2071 = vcmp.gt.f32.partialorder %v2055, 0.0
      %vm2072 = vcmp.gt.f32.partialorder %v2056, 0.0
      %vm2073 = vcmp.gt.f32.partialorder %v2057, 0.0
      %vm2074 = vcmp.gt.f32.partialorder %v2058, 0.0
      %vm2075 = vcmp.gt.f32.partialorder %v2059, 0.0
      %vm2076 = vcmp.gt.f32.partialorder %v2060, 0.0
      %vm2077 = vcmp.gt.f32.partialorder %v2061, 0.0
      %vm2078 = vcmp.gt.f32.partialorder %v2062, 0.0
      %vm2079 = vcmp.gt.f32.partialorder %v2063, 0.0
      %vm2080 = vcmp.gt.f32.partialorder %v2064, 0.0
      %v2081 = vmul.f32 %v2049, 0.1
      %v2082 = vmul.f32 %v2050, 0.1
      %v2083 = vmul.f32 %v2051, 0.1
      %v2084 = vmul.f32 %v2052, 0.1
      %v2085 = vmul.f32 %v2053, 0.1
      %v2086 = vmul.f32 %v2054, 0.1
      %v2087 = vmul.f32 %v2055, 0.1
      %v2088 = vmul.f32 %v2056, 0.1
      %v2089 = vmul.f32 %v2057, 0.1
      %v2090 = vmul.f32 %v2058, 0.1
      %v2091 = vmul.f32 %v2059, 0.1
      %v2092 = vmul.f32 %v2060, 0.1
      %v2093 = vmul.f32 %v2061, 0.1
      %v2094 = vmul.f32 %v2062, 0.1
      %v2095 = vmul.f32 %v2063, 0.1
      %v2096 = vmul.f32 %v2064, 0.1
      %v2097 = vsel %vm2065, %v2049, %v2081
      %v2098 = vsel %vm2066, %v2050, %v2082
      %v2099 = vsel %vm2067, %v2051, %v2083
      %v2100 = vsel %vm2068, %v2052, %v2084
      %v2101 = vsel %vm2069, %v2053, %v2085
      %v2102 = vsel %vm2070, %v2054, %v2086
      %v2103 = vsel %vm2071, %v2055, %v2087
      %v2104 = vsel %vm2072, %v2056, %v2088
      %v2105 = vsel %vm2073, %v2057, %v2089
      %v2106 = vsel %vm2074, %v2058, %v2090
      %v2107 = vsel %vm2075, %v2059, %v2091
      %v2108 = vsel %vm2076, %v2060, %v2092
      %v2109 = vsel %vm2077, %v2061, %v2093
      %v2110 = vsel %vm2078, %v2062, %v2094
      %v2111 = vsel %vm2079, %v2063, %v2095
      %v2112 = vsel %vm2080, %v2064, %v2096
      %v2113 = vpack.c.bf16 %v2098, %v2097
      %v2114 = vpack.c.bf16 %v2100, %v2099
      %v2115 = vpack.c.bf16 %v2102, %v2101
      %v2116 = vpack.c.bf16 %v2104, %v2103
      %v2117 = vpack.c.bf16 %v2106, %v2105
      %v2118 = vpack.c.bf16 %v2108, %v2107
      %v2119 = vpack.c.bf16 %v2110, %v2109
      %v2120 = vpack.c.bf16 %v2112, %v2111
      %v2129 = vunpack.c.l.b16 %v2113
      %v2130 = vunpack.c.h.b16 %v2113
      %v2131 = vunpack.c.l.b16 %v2114
      %v2132 = vunpack.c.h.b16 %v2114
      %v2133 = vunpack.c.l.b16 %v2115
      %v2134 = vunpack.c.h.b16 %v2115
      %v2135 = vunpack.c.l.b16 %v2116
      %v2136 = vunpack.c.h.b16 %v2116
      %v2137 = vunpack.c.l.b16 %v2117
      %v2138 = vunpack.c.h.b16 %v2117
      %v2139 = vunpack.c.l.b16 %v2118
      %v2140 = vunpack.c.h.b16 %v2118
      %v2141 = vunpack.c.l.b16 %v2119
      %v2142 = vunpack.c.h.b16 %v2119
      %v2143 = vunpack.c.l.b16 %v2120
      %v2144 = vunpack.c.h.b16 %v2120
      %v2145 = vpack.c.b16 %v2129, %v2129
      %v2146 = vpack.c.b16 %v2130, %v2130
      %v2147 = vpack.c.b16 %v2131, %v2131
      %v2148 = vpack.c.b16 %v2132, %v2132
      %v2149 = vpack.c.b16 %v2133, %v2133
      %v2150 = vpack.c.b16 %v2134, %v2134
      %v2151 = vpack.c.b16 %v2135, %v2135
      %v2152 = vpack.c.b16 %v2136, %v2136
      %v2153 = vpack.c.b16 %v2137, %v2137
      %v2154 = vpack.c.b16 %v2138, %v2138
      %v2155 = vpack.c.b16 %v2139, %v2139
      %v2156 = vpack.c.b16 %v2140, %v2140
      %v2157 = vpack.c.b16 %v2141, %v2141
      %v2158 = vpack.c.b16 %v2142, %v2142
      %v2159 = vpack.c.b16 %v2143, %v2143
      %v2160 = vpack.c.b16 %v2144, %v2144
      %vm2177 = vcmask 60416
      %2178 = vst.msk [vmem:[%s219] sm:$0xf] %vm2177, %v2145
      %2179 = vst.msk [vmem:[%s219 + $0x4] sm:$0xf] %vm2177, %v2146
      %2180 = vst.msk [vmem:[%s219 + $0x8] sm:$0xf] %vm2177, %v2147
      %2181 = vst.msk [vmem:[%s219 + $0xc] sm:$0xf] %vm2177, %v2148
      %2182 = vst.msk [vmem:[%s219 + $0x10] sm:$0xf] %vm2177, %v2149
      %2183 = vst.msk [vmem:[%s219 + $0x14] sm:$0xf] %vm2177, %v2150
      %2184 = vst.msk [vmem:[%s219 + $0x18] sm:$0xf] %vm2177, %v2151
      %2185 = vst.msk [vmem:[%s219 + $0x1c] sm:$0xf] %vm2177, %v2152
      %2186 = vst.msk [vmem:[%s219 + $0x20] sm:$0xf] %vm2177, %v2153
      %2187 = vst.msk [vmem:[%s219 + $0x24] sm:$0xf] %vm2177, %v2154
      %2188 = vst.msk [vmem:[%s219 + $0x28] sm:$0xf] %vm2177, %v2155
      %2189 = vst.msk [vmem:[%s219 + $0x2c] sm:$0xf] %vm2177, %v2156
      %2190 = vst.msk [vmem:[%s219 + $0x30] sm:$0xf] %vm2177, %v2157
      %2191 = vst.msk [vmem:[%s219 + $0x34] sm:$0xf] %vm2177, %v2158
      %2192 = vst.msk [vmem:[%s219 + $0x38] sm:$0xf] %vm2177, %v2159
      %2193 = vst.msk [vmem:[%s219 + $0x3c] sm:$0xf] %vm2177, %v2160
      %s2194 = smul.u32 16, %s20
      %p2195 = scmp.lt.s32.totalorder %s19, 1
      %s2196 = scalar_select %p2195, %s19, 1
      %p2197 = scmp.lt.s32.totalorder %s2194, 31
      %s2198 = scalar_select %p2197, %s2194, 31
      %s2199 = smul.addr %s2196, 32
      %s2200 = sadd.s32 %s2198, %s2199
      %s2201 = smul.addr %s2200, 4
      %s2202 = scalar_lea.vmem %s4, %s2201
      // Predicated region
      $region37: #{conv_forward.1} parent=35 // pred_check
        %p2203 = pneg %p136
      $region38: #{conv_forward.1} parent=35 // pred_check_branch
        %2205 = sbr.rel (%p2203) target = $region40
      $region39: #{conv_forward.1} parent=35 // pred_region
        %s2206 = smul.u32 16, %s20
      $region40: #{conv_forward.1} parent=35 // pred_fallthru
        _
    $region36: #{conv_forward.1} parent=5 // pred_fallthru
      _
    %p2207 = scmp.le.s32.totalorder 2, %s10
    // Predicated region
    $region41: #{conv_forward.1} parent=5 // pred_check
      %p2208 = pneg %p2207
    $region42: #{conv_forward.1} parent=5 // pred_check_branch
      %2210 = sbr.rel (%p2208) target = $region44
    $region43: #{conv_forward.1} parent=5 // pred_region
      %s2211 = ssub.s32 %s10, 2
      // Predicated region
      $region45: #{conv_forward.1} parent=43 // pred_check
        %p2212 = pneg %p142
      $region46: #{conv_forward.1} parent=43 // pred_check_branch
        %2214 = sbr.rel (%p2212) target = $region48
      $region47: #{conv_forward.1} parent=43 // pred_region
        %s2215 = smul.u32 16, %s22
        %p2216 = scmp.lt.s32.totalorder %s21, 1
        %s2217 = scalar_select %p2216, %s21, 1
        %p2218 = scmp.lt.s32.totalorder %s2215, 31
        %s2219 = scalar_select %p2218, %s2215, 31
        %s2220 = smul.addr %s2217, 32
        %s2221 = sadd.s32 %s2219, %s2220
        %s2222 = smul.addr %s2221, 4
        %s2223 = scalar_lea.vmem %s4, %s2222
      $region48: #{conv_forward.1} parent=43 // pred_fallthru
        _
    $region44: #{conv_forward.1} parent=5 // pred_fallthru
      _
  $region6: #{conv_forward.1} parent=0 // loop_footer
    %s14 = sadd.s32 1, %s10
  $region7: #{conv_forward.1} parent=0 // loop_footer_branch
    %9 = sbr.rel target = $region3
  $region8: #{conv_forward.1} parent=0 // loop_exit
    _

</llo_original>
